<compile_context>
chip_gen: v5e
topology: v5e:2x2
jax: 0.10.0
libtpu: 0.0.40
codegen_flags: <defaults>
</compile_context>

<pallas_src>
import functools
from types import SimpleNamespace

import jax
import jax.numpy as jnp
from jax.experimental import pallas as pl
from jax.experimental.pallas import tpu as pltpu


_STATS_LANES = 128  # lane-dense stats row; lanes [0:8] carry the 8 sums


def _vmem_limit_bytes():
    """Per-chip VMEM budget: physical minus >=16 MiB headroom, capped at 100 MiB."""
    try:
        phys = int(pltpu.get_tpu_info().vmem_capacity_bytes)
    except Exception:  # conservative fallback (v7x per-core physical)
        phys = 64 * 1024 * 1024
    return int(min(max(phys - 16 * 1024 * 1024, 32 * 1024 * 1024),
                   100 * 1024 * 1024))


# ---------------------------------------------------------------------------
# Separable 3x3 reflection-padded average pool
# (== ReflectionPad2d(1) + AvgPool2d(3, stride=1), per channel)
# ---------------------------------------------------------------------------
def _pool3_reflect(x, border_masks, *, use_roll):
    """x: (H, W).  3-tap sums along W (lanes) then H (sublanes); reflection
    (PyTorch ReflectionPad2d) reuses the interior neighbour at the borders."""
    H, W = x.shape
    first_col, last_col, first_row, last_row = border_masks

    # horizontal (lane) shifts
    if use_roll:
        xl = pltpu.roll(x, 1, axis=-1)       # xl[i, j] = x[i, j-1] (wraps at j=0)
        xr = pltpu.roll(x, W - 1, axis=-1)   # xr[i, j] = x[i, j+1] (wraps at j=W-1)
    else:
        xl = jnp.concatenate([x[:, :1], x[:, :W - 1]], axis=1)
        xr = jnp.concatenate([x[:, 1:], x[:, W - 1:]], axis=1)
    left = jnp.where(first_col, xr, xl)      # j==0 -> reflect to x[:, 1]
    right = jnp.where(last_col, xl, xr)      # j==W-1 -> reflect to x[:, W-2]
    s = left + x + right

    # vertical (sublane) shifts
    if use_roll:
        su = pltpu.roll(s, 1, axis=-2)
        sd = pltpu.roll(s, H - 1, axis=-2)
    else:
        su = jnp.concatenate([s[:1, :], s[:H - 1, :]], axis=0)
        sd = jnp.concatenate([s[1:, :], s[H - 1:, :]], axis=0)
    up = jnp.where(first_row, sd, su)        # i==0 -> reflect to s[1, :]
    down = jnp.where(last_row, su, sd)       # i==H-1 -> reflect to s[H-2, :]
    return (up + s + down) * (1.0 / 9.0)


# ---------------------------------------------------------------------------
# Pallas kernel: one (pair, channel) step for BOTH warp directions
# ---------------------------------------------------------------------------
def _pair_stats_kernel(img1_ref, rec1_ref, mask1_ref, pdep1_ref, cdep1_ref, fd1_ref,
                       img2_ref, rec2_ref, mask2_ref, pdep2_ref, cdep2_ref, fd2_ref,
                       stats_ref, err_ref, *,
                       ssim_weight, num_channels, use_roll, compute_dtype):
    c = pl.program_id(1)
    H, W = img1_ref.shape[2], img1_ref.shape[3]

    # Border masks shared by all pool calls in this step (cheap VPU iota+cmp).
    lane = jax.lax.broadcasted_iota(jnp.int32, (H, W), 1)
    row = jax.lax.broadcasted_iota(jnp.int32, (H, W), 0)
    border_masks = (lane == 0, lane == W - 1, row == 0, row == H - 1)

    def pool3(x):
        return _pool3_reflect(x, border_masks, use_roll=use_roll)

    def direction(img_ref, rec_ref, mask_ref):
        img = img_ref[0, 0].astype(compute_dtype)        # (H, W), this channel
        rec = rec_ref[0, 0].astype(compute_dtype)
        msk = mask_ref[0, 0]                              # (H, W), f32
        diff = jnp.abs(img - rec)
        if ssim_weight > 0:
            mu_x = pool3(img)
            mu_y = pool3(rec)
            sigma_x = pool3(img * img) - mu_x * mu_x
            sigma_y = pool3(rec * rec) - mu_y * mu_y
            sigma_xy = pool3(img * rec) - mu_x * mu_y
            c1 = 0.01 ** 2
            c2 = 0.03 ** 2
            ssim_n = (2.0 * mu_x * mu_y + c1) * (2.0 * sigma_xy + c2)
            ssim_d = (mu_x * mu_x + mu_y * mu_y + c1) * (sigma_x + sigma_y + c2)
            ssim_map = jnp.clip((1.0 - ssim_n / ssim_d) * 0.5, 0.0, 1.0)
            diff = (1.0 - ssim_weight) * diff + ssim_weight * ssim_map
        contrib = diff.astype(jnp.float32) * msk          # masked per-channel photo map
        return contrib, jnp.sum(contrib, keepdims=True)   # (H, W), (1, 1)

    contrib1, p1 = direction(img1_ref, rec1_ref, mask1_ref)
    contrib2, p2 = direction(img2_ref, rec2_ref, mask2_ref)
    inv_c = 1.0 / float(num_channels)

    @pl.when(c == 0)
    def _():
        # Channel-invariant terms (geo / flow / mask sums) computed once per pair.
        def chan_free(mask_ref, pdep_ref, cdep_ref, fd_ref):
            msk = mask_ref[0, 0]
            pd = pdep_ref[0, 0]
            cd = cdep_ref[0, 0]
            # NOTE: exact division (matches the reference; 0/0 -> NaN as in torch).
            depth_map = jnp.clip(jnp.abs(cd - pd) / jnp.abs(cd + pd), 0.0, 1.0) * msk
            flow_map = fd_ref[0] * msk
            return (jnp.sum(depth_map, keepdims=True),
                    jnp.sum(flow_map, keepdims=True),
                    jnp.sum(msk, keepdims=True))

        d1, f1, m1 = chan_free(mask1_ref, pdep1_ref, cdep1_ref, fd1_ref)
        d2, f2, m2 = chan_free(mask2_ref, pdep2_ref, cdep2_ref, fd2_ref)
        pad = jnp.zeros((1, stats_ref.shape[2] - 8), jnp.float32)
        stats_ref[0] = jnp.concatenate(
            [p1, d1, f1, m1, p2, d2, f2, m2, pad], axis=1)
        # err_mask uses direction 0 only (target = img1); diff >= 0 so
        # |mean over channels| == (sum over channels) / C, like the reference.
        err_ref[0, 0] = contrib1 * inv_c

    @pl.when(c > 0)
    def _():
        z3 = jnp.zeros((1, 3), jnp.float32)
        pad = jnp.zeros((1, stats_ref.shape[2] - 5), jnp.float32)
        stats_ref[0] = stats_ref[0] + jnp.concatenate([p1, z3, p2, pad], axis=1)
        err_ref[0, 0] = err_ref[0, 0] + contrib1 * inv_c


def _pairwise_stats(img1, rec1, mask1, pdep1, cdep1, fd1,
                    img2, rec2, mask2, pdep2, cdep2, fd2,
                    *, ssim_weight, compute_dtype=jnp.float32):
    """All inputs NCHW (flow residuals are (n, H, W)).  Returns
    (stats (n, 1, 128) with lanes [photo1, geo1, flow1, mask1, photo2, geo2,
     flow2, mask2, 0...], err_mask (n, 1, H, W))."""
    n, C, H, W = img1.shape
    # Conservative: only use Mosaic rotate on tile-aligned shapes; otherwise the
    # proven slice+concat shifts (same arithmetic).
    use_roll = (H % 8 == 0) and (W % 128 == 0)

    kern = functools.partial(
        _pair_stats_kernel, ssim_weight=float(ssim_weight), num_channels=C,
        use_roll=use_roll, compute_dtype=compute_dtype)

    chan_spec = pl.BlockSpec((1, 1, H, W), lambda p, c: (p, c, 0, 0))  # per-channel
    pair_spec = pl.BlockSpec((1, 1, H, W), lambda p, c: (p, 0, 0, 0))  # channel-invariant
    fd_spec = pl.BlockSpec((1, H, W), lambda p, c: (p, 0, 0))

    stats, err = pl.pallas_call(
        kern,
        out_shape=(jax.ShapeDtypeStruct((n, 1, _STATS_LANES), jnp.float32),
                   jax.ShapeDtypeStruct((n, 1, H, W), jnp.float32)),
        grid=(n, C),   # inner axis = channel (accumulation / output revisit)
        in_specs=[chan_spec, chan_spec, pair_spec, pair_spec, pair_spec, fd_spec,
                  chan_spec, chan_spec, pair_spec, pair_spec, pair_spec, fd_spec],
        out_specs=(pl.BlockSpec((1, 1, _STATS_LANES), lambda p, c: (p, 0, 0)),
                   pl.BlockSpec((1, 1, H, W), lambda p, c: (p, 0, 0, 0))),
        compiler_params=pltpu.CompilerParams(
            dimension_semantics=("parallel", "arbitrary"),
            vmem_limit_bytes=_vmem_limit_bytes()),
    )(img1, rec1, mask1, pdep1, cdep1, fd1,
      img2, rec2, mask2, pdep2, cdep2, fd2)
    return stats, err


# ---------------------------------------------------------------------------
# Deterministic stand-in for the external warper
# ---------------------------------------------------------------------------
class StubWarper:
    def __init__(self, height, width):
        ys, xs = jnp.meshgrid(jnp.arange(height, dtype=jnp.float32),
                              jnp.arange(width, dtype=jnp.float32), indexing='ij')
        self.pixel_map = jnp.stack([xs, ys], axis=-1)[None]          # (1,H,W,2): (x,y)
        gx = xs * 2.0 / (width - 1) - 1.0
        gy = ys * 2.0 / (height - 1) - 1.0
        self._grid_norm = jnp.stack([gx, gy], axis=-1)               # (H,W,2)

    def inverse_warp(self, img_src, depth_tgt, depth_src, pose):
        # TODO(synk): real inverse_warp (depth reprojection + grid_sample) lives
        # outside loss.py; this deterministic stand-in only provides shapes/semantics.
        B = img_src.shape[0]
        t = jnp.tanh(pose[:, :3, 3].sum(axis=-1))[:, None, None, None]   # (B,1,1,1)
        rec = 0.5 * (img_src + jnp.roll(img_src, 1, axis=-1)) * (1.0 + 0.05 * t)
        computed_depth = depth_tgt * (1.0 + 0.05 * t)
        projected_depth = jnp.roll(depth_src, 1, axis=-1)
        warp_sample = self._grid_norm[None] + 0.05 * t                   # (B,H,W,2)
        warp_sample = jnp.broadcast_to(warp_sample, (B,) + self._grid_norm.shape)
        valid = jnp.all(jnp.abs(warp_sample) <= 1.0, axis=-1)
        valid = valid[:, None, :, :].astype(jnp.float32)                 # (B,1,H,W)
        return rec, valid, projected_depth, computed_depth, warp_sample, None, None


# ---------------------------------------------------------------------------
# Loss module (forward pass); hot path delegated to the Pallas kernel
# ---------------------------------------------------------------------------
class PallasLoss:
    def __init__(self, opt, warper, compute_dtype=jnp.float32):
        self.opt = opt
        self.scales = opt.scales
        self.intervals = opt.intervals
        self.ssim_weight = opt.ssim_weight
        self.warper = warper
        self.width = opt.width
        self.height = opt.height
        # Set compute_dtype=jnp.bfloat16 on v6e/v7x for ~2x VPU throughput on the
        # SSIM math (keep f32 on v5e / when bit-parity with PyTorch matters).
        self.compute_dtype = compute_dtype
        self.weights = {'photo': opt.photometric_loss, 'flow': opt.flow_loss,
                        'geo': opt.geometry_loss, 'ds': opt.disparity_smoothness_loss}
        self.pixel_map = jnp.transpose(warper.pixel_map, (0, 3, 1, 2))   # (1,2,H,W)
        self.pixel_map_norm = jnp.stack(
            [self.pixel_map[:, 0] * 2.0 / (self.width - 1) - 1.0,
             self.pixel_map[:, 1] * 2.0 / (self.height - 1) - 1.0], axis=1)

    def preprocess_minibatch_weights(self, items):
        opt = self.opt
        self.bs = items['imgs'].shape[0]
        self.alpha, self.beta = {}, {}
        for i in self.intervals:
            if i >= self.bs:
                continue
            self.alpha[i] = float(opt.adaptive_alpha) ** i
            self.beta[i] = float(opt.adaptive_beta) ** i
        a_sum = sum(self.alpha.values())
        b_sum = sum(self.beta.values())
        for k in self.alpha:
            self.alpha[k] /= a_sum
            self.beta[k] /= b_sum

    def compute_pairwise_loss(self, item):
        img1, img2 = item['img1'], item['img2']
        pose12, pose21 = item['pose12'], item['pose21']
        C = img1.shape[1]
        loss_items = {k: 0.0 for k in self.weights}
        err_mask = None
        for scale in self.scales:
            d1 = item['depth1'][scale]
            d2 = item['depth2'][scale]
            rec1, mask1, pdep1, cdep1, ws1, _, _ = self.warper.inverse_warp(img2, d1, d2, pose12)
            rec2, mask2, pdep2, cdep2, ws2, _, _ = self.warper.inverse_warp(img1, d2, d1, pose21)

            # Flow residual magnitude computed in NHWC by a small XLA fusion
            # (reads 16 B/px, writes 4 B/px) instead of materializing two NCHW
            # permutes per direction (32 B/px of pure copy, as in the reference).
            fd1 = jnp.sum(jnp.abs(ws1 - item['flow12']), axis=-1)       # (n,H,W)
            fd2 = jnp.sum(jnp.abs(ws2 - item['flow21']), axis=-1)       # (n,H,W)

            # No stacking / concatenation: each stream goes to pallas_call as-is.
            stats, errm = _pairwise_stats(
                img1, rec1, mask1, pdep1, cdep1, fd1,
                img2, rec2, mask2, pdep2, cdep2, fd2,
                ssim_weight=self.ssim_weight, compute_dtype=self.compute_dtype)

            tot = jnp.sum(stats[:, 0, :8], axis=0)    # sums over pairs, per direction
            # mean_on_mask: photo mask is expanded over C channels.
            # NOTE: like the reference, no guard against an all-zero mask sum.
            loss_items['geo'] += item['alpha'] * (tot[1] / tot[3] + tot[5] / tot[7])
            loss_items['photo'] += item['alpha'] * (tot[0] / (C * tot[3]) + tot[4] / (C * tot[7]))
            loss_items['flow'] += item['beta'] * (tot[2] / tot[3] + tot[6] / tot[7])
            err_mask = errm                           # (n,1,H,W), last scale wins
        return loss_items, err_mask

    def compute_loss_terms(self, items):
        bs = items['imgs'].shape[0]
        loss_items = {k: 0.0 for k in self.weights}
        poses, poses_inv = items['poses'], items['poses_inv']
        for i in self.intervals:
            if i >= bs:
                continue
            pair_item = {
                'img1': items['imgs'][:-i], 'img2': items['imgs'][i:],
                'mask1': items['mask'][:-i], 'mask2': items['mask'][i:],
                'depth1': [d[:-i] for d in items['depths']],
                'depth2': [d[i:] for d in items['depths']],
                'pose21': poses_inv[:-i] @ poses[i:],
                'pose12': poses_inv[i:] @ poses[:-i],
                'flow12': items['flow_fwd', i], 'flow21': items['flow_bwd', i],
                'alpha': self.alpha[i], 'beta': self.beta[i],
            }
            pair_loss, err_mask = self.compute_pairwise_loss(pair_item)
            for name in loss_items:
                if name in pair_loss:
                    loss_items[name] += pair_loss[name]
            if 'err_mask' not in items:
                items['err_mask'] = err_mask
            else:
                # PyTorch reference: err_mask_total[:m - n_prev] += err_mask with
                # m < n_prev, i.e. add into the first m rows.
                m = err_mask.shape[0]
                items['err_mask'] = items['err_mask'].at[:m].add(err_mask)
        return loss_items

    def forward(self, items):
        loss_items = self.compute_loss_terms(items)
        loss_items['full'] = 0.0
        for key in self.weights:
            loss_items['full'] += self.weights[key] * loss_items[key]
        return loss_items


# ---------------------------------------------------------------------------
if __name__ == "__main__":
    key = jax.random.PRNGKey(0)
    bs, C, H, W = 4, 3, 16, 16

    opt = SimpleNamespace(
        cuda='tpu', scales=[0], intervals=[1, 2], ssim_weight=0.85,
        width=W, height=H,
        photometric_loss=1.0, flow_loss=0.1, geometry_loss=0.5,
        disparity_smoothness_loss=0.1,
        adaptive_alpha=0.5, adaptive_beta=0.8)

    warper = StubWarper(H, W)
    loss_mod = PallasLoss(opt, warper)

    k = jax.random.split(key, 8)
    imgs = jax.random.uniform(k[0], (bs, C, H, W), jnp.float32)
    depths = [jax.random.uniform(k[1], (bs, 1, H, W), jnp.float32,
                                 minval=0.5, maxval=2.0)]
    mask_in = jnp.ones((bs, 1, H, W), jnp.float32)

    t = 0.1 * jax.random.normal(k[2], (bs, 3), jnp.float32)
    eye = jnp.broadcast_to(jnp.eye(4, dtype=jnp.float32), (bs, 4, 4))
    poses = eye.at[:, :3, 3].set(t)
    poses_inv = eye.at[:, :3, 3].set(-t)

    items = {
        'imgs': imgs, 'mask': mask_in, 'depths': depths,
        'poses': poses, 'poses_inv': poses_inv,
        ('flow_fwd', 1): 0.1 * jax.random.normal(k[3], (bs - 1, H, W, 2), jnp.float32),
        ('flow_bwd', 1): 0.1 * jax.random.normal(k[4], (bs - 1, H, W, 2), jnp.float32),
        ('flow_fwd', 2): 0.1 * jax.random.normal(k[5], (bs - 2, H, W, 2), jnp.float32),
        ('flow_bwd', 2): 0.1 * jax.random.normal(k[6], (bs - 2, H, W, 2), jnp.float32),
    }

    # In the original training loop, preprocess_minibatch_weights is called
    # externally before forward (it sets self.alpha / self.beta).
    loss_mod.preprocess_minibatch_weights(items)
    out = loss_mod.forward(items)
    jax.block_until_ready(out['full'])
    print("KERNEL_OK")
</pallas_src>

<mosaic_0001>
module attributes {stable_mosaic.version = 11 : i64} {
  func.func @_pair_stats_kernel(%arg0: i32, %arg1: i32, %arg2: memref<1x1x16x16xf32, #tpu.memory_space<vmem>>, %arg3: memref<1x1x16x16xf32, #tpu.memory_space<vmem>>, %arg4: memref<1x1x16x16xf32, #tpu.memory_space<vmem>>, %arg5: memref<1x1x16x16xf32, #tpu.memory_space<vmem>>, %arg6: memref<1x1x16x16xf32, #tpu.memory_space<vmem>>, %arg7: memref<1x16x16xf32, #tpu.memory_space<vmem>>, %arg8: memref<1x1x16x16xf32, #tpu.memory_space<vmem>>, %arg9: memref<1x1x16x16xf32, #tpu.memory_space<vmem>>, %arg10: memref<1x1x16x16xf32, #tpu.memory_space<vmem>>, %arg11: memref<1x1x16x16xf32, #tpu.memory_space<vmem>>, %arg12: memref<1x1x16x16xf32, #tpu.memory_space<vmem>>, %arg13: memref<1x16x16xf32, #tpu.memory_space<vmem>>, %arg14: memref<1x1x128xf32, #tpu.memory_space<vmem>>, %arg15: memref<1x1x16x16xf32, #tpu.memory_space<vmem>>) attributes {dimension_semantics = [#tpu.dimension_semantics<parallel>, #tpu.dimension_semantics<arbitrary>], iteration_bounds = array<i64: 3, 3>, scalar_prefetch = 0 : i64, scratch_operands = 0 : i64, tpu.core_type = #tpu.core_type<tc>, window_params = [{transform_indices = @transform_0, window_bounds = array<i64: 1, 1, 16, 16>}, {transform_indices = @transform_1, window_bounds = array<i64: 1, 1, 16, 16>}, {transform_indices = @transform_2, window_bounds = array<i64: 1, 1, 16, 16>}, {transform_indices = @transform_3, window_bounds = array<i64: 1, 1, 16, 16>}, {transform_indices = @transform_4, window_bounds = array<i64: 1, 1, 16, 16>}, {transform_indices = @transform_5, window_bounds = array<i64: 1, 16, 16>}, {transform_indices = @transform_6, window_bounds = array<i64: 1, 1, 16, 16>}, {transform_indices = @transform_7, window_bounds = array<i64: 1, 1, 16, 16>}, {transform_indices = @transform_8, window_bounds = array<i64: 1, 1, 16, 16>}, {transform_indices = @transform_9, window_bounds = array<i64: 1, 1, 16, 16>}, {transform_indices = @transform_10, window_bounds = array<i64: 1, 1, 16, 16>}, {transform_indices = @transform_11, window_bounds = array<i64: 1, 16, 16>}, {transform_indices = @transform_12, window_bounds = array<i64: 1, 1, 128>}, {transform_indices = @transform_13, window_bounds = array<i64: 1, 1, 16, 16>}]} {
    %0 = tpu.iota {dimensions = array<i32: 1>} : vector<16x16xi32>
    %1 = tpu.iota {dimensions = array<i32: 0>} : vector<16x16xi32>
    %c0_i32 = arith.constant 0 : i32
    %2 = vector.broadcast %c0_i32 : i32 to vector<16x16xi32>
    %3 = arith.cmpi eq, %0, %2 : vector<16x16xi32>
    %c15_i32 = arith.constant 15 : i32
    %4 = vector.broadcast %c15_i32 : i32 to vector<16x16xi32>
    %5 = arith.cmpi eq, %0, %4 : vector<16x16xi32>
    %c0_i32_0 = arith.constant 0 : i32
    %6 = vector.broadcast %c0_i32_0 : i32 to vector<16x16xi32>
    %7 = arith.cmpi eq, %1, %6 : vector<16x16xi32>
    %c15_i32_1 = arith.constant 15 : i32
    %8 = vector.broadcast %c15_i32_1 : i32 to vector<16x16xi32>
    %9 = arith.cmpi eq, %1, %8 : vector<16x16xi32>
    %c0 = arith.constant 0 : index
    %c0_2 = arith.constant 0 : index
    %c0_3 = arith.constant 0 : index
    %c0_4 = arith.constant 0 : index
    %10 = vector.load %arg2[%c0, %c0_2, %c0_3, %c0_4] : memref<1x1x16x16xf32, #tpu.memory_space<vmem>>, vector<1x1x16x16xf32>
    %11 = vector.shape_cast %10 : vector<1x1x16x16xf32> to vector<16x16xf32>
    %c0_5 = arith.constant 0 : index
    %c0_6 = arith.constant 0 : index
    %c0_7 = arith.constant 0 : index
    %c0_8 = arith.constant 0 : index
    %12 = vector.load %arg3[%c0_5, %c0_6, %c0_7, %c0_8] : memref<1x1x16x16xf32, #tpu.memory_space<vmem>>, vector<1x1x16x16xf32>
    %13 = vector.shape_cast %12 : vector<1x1x16x16xf32> to vector<16x16xf32>
    %c0_9 = arith.constant 0 : index
    %c0_10 = arith.constant 0 : index
    %c0_11 = arith.constant 0 : index
    %c0_12 = arith.constant 0 : index
    %14 = vector.load %arg4[%c0_9, %c0_10, %c0_11, %c0_12] : memref<1x1x16x16xf32, #tpu.memory_space<vmem>>, vector<1x1x16x16xf32>
    %15 = vector.shape_cast %14 : vector<1x1x16x16xf32> to vector<16x16xf32>
    %16 = arith.subf %11, %13 : vector<16x16xf32>
    %17 = math.absf %16 : vector<16x16xf32>
    %18 = vector.extract_strided_slice %11 {offsets = [0, 0], sizes = [16, 1], strides = [1, 1]} : vector<16x16xf32> to vector<16x1xf32>
    %19 = vector.extract_strided_slice %11 {offsets = [0, 0], sizes = [16, 15], strides = [1, 1]} : vector<16x16xf32> to vector<16x15xf32>
    %20 = tpu.concatenate %18, %19 in 1 : vector<16x1xf32>, vector<16x15xf32> -> vector<16x16xf32>
    %21 = vector.extract_strided_slice %11 {offsets = [0, 1], sizes = [16, 15], strides = [1, 1]} : vector<16x16xf32> to vector<16x15xf32>
    %22 = vector.extract_strided_slice %11 {offsets = [0, 15], sizes = [16, 1], strides = [1, 1]} : vector<16x16xf32> to vector<16x1xf32>
    %23 = tpu.concatenate %21, %22 in 1 : vector<16x15xf32>, vector<16x1xf32> -> vector<16x16xf32>
    %24 = arith.select %3, %23, %20 : vector<16x16xi1>, vector<16x16xf32>
    %25 = arith.select %5, %20, %23 : vector<16x16xi1>, vector<16x16xf32>
    %26 = arith.addf %24, %11 : vector<16x16xf32>
    %27 = arith.addf %26, %25 : vector<16x16xf32>
    %28 = vector.extract_strided_slice %27 {offsets = [0, 0], sizes = [1, 16], strides = [1, 1]} : vector<16x16xf32> to vector<1x16xf32>
    %29 = vector.extract_strided_slice %27 {offsets = [0, 0], sizes = [15, 16], strides = [1, 1]} : vector<16x16xf32> to vector<15x16xf32>
    %30 = tpu.concatenate %28, %29 in 0 : vector<1x16xf32>, vector<15x16xf32> -> vector<16x16xf32>
    %31 = vector.extract_strided_slice %27 {offsets = [1, 0], sizes = [15, 16], strides = [1, 1]} : vector<16x16xf32> to vector<15x16xf32>
    %32 = vector.extract_strided_slice %27 {offsets = [15, 0], sizes = [1, 16], strides = [1, 1]} : vector<16x16xf32> to vector<1x16xf32>
    %33 = tpu.concatenate %31, %32 in 0 : vector<15x16xf32>, vector<1x16xf32> -> vector<16x16xf32>
    %34 = arith.select %7, %33, %30 : vector<16x16xi1>, vector<16x16xf32>
    %35 = arith.select %9, %30, %33 : vector<16x16xi1>, vector<16x16xf32>
    %36 = arith.addf %34, %27 : vector<16x16xf32>
    %37 = arith.addf %36, %35 : vector<16x16xf32>
    %cst = arith.constant 0.111111112 : f32
    %38 = vector.broadcast %cst : f32 to vector<16x16xf32>
    %39 = arith.mulf %37, %38 : vector<16x16xf32>
    %40 = vector.extract_strided_slice %13 {offsets = [0, 0], sizes = [16, 1], strides = [1, 1]} : vector<16x16xf32> to vector<16x1xf32>
    %41 = vector.extract_strided_slice %13 {offsets = [0, 0], sizes = [16, 15], strides = [1, 1]} : vector<16x16xf32> to vector<16x15xf32>
    %42 = tpu.concatenate %40, %41 in 1 : vector<16x1xf32>, vector<16x15xf32> -> vector<16x16xf32>
    %43 = vector.extract_strided_slice %13 {offsets = [0, 1], sizes = [16, 15], strides = [1, 1]} : vector<16x16xf32> to vector<16x15xf32>
    %44 = vector.extract_strided_slice %13 {offsets = [0, 15], sizes = [16, 1], strides = [1, 1]} : vector<16x16xf32> to vector<16x1xf32>
    %45 = tpu.concatenate %43, %44 in 1 : vector<16x15xf32>, vector<16x1xf32> -> vector<16x16xf32>
    %46 = arith.select %3, %45, %42 : vector<16x16xi1>, vector<16x16xf32>
    %47 = arith.select %5, %42, %45 : vector<16x16xi1>, vector<16x16xf32>
    %48 = arith.addf %46, %13 : vector<16x16xf32>
    %49 = arith.addf %48, %47 : vector<16x16xf32>
    %50 = vector.extract_strided_slice %49 {offsets = [0, 0], sizes = [1, 16], strides = [1, 1]} : vector<16x16xf32> to vector<1x16xf32>
    %51 = vector.extract_strided_slice %49 {offsets = [0, 0], sizes = [15, 16], strides = [1, 1]} : vector<16x16xf32> to vector<15x16xf32>
    %52 = tpu.concatenate %50, %51 in 0 : vector<1x16xf32>, vector<15x16xf32> -> vector<16x16xf32>
    %53 = vector.extract_strided_slice %49 {offsets = [1, 0], sizes = [15, 16], strides = [1, 1]} : vector<16x16xf32> to vector<15x16xf32>
    %54 = vector.extract_strided_slice %49 {offsets = [15, 0], sizes = [1, 16], strides = [1, 1]} : vector<16x16xf32> to vector<1x16xf32>
    %55 = tpu.concatenate %53, %54 in 0 : vector<15x16xf32>, vector<1x16xf32> -> vector<16x16xf32>
    %56 = arith.select %7, %55, %52 : vector<16x16xi1>, vector<16x16xf32>
    %57 = arith.select %9, %52, %55 : vector<16x16xi1>, vector<16x16xf32>
    %58 = arith.addf %56, %49 : vector<16x16xf32>
    %59 = arith.addf %58, %57 : vector<16x16xf32>
    %cst_13 = arith.constant 0.111111112 : f32
    %60 = vector.broadcast %cst_13 : f32 to vector<16x16xf32>
    %61 = arith.mulf %59, %60 : vector<16x16xf32>
    %62 = arith.mulf %11, %11 : vector<16x16xf32>
    %63 = vector.extract_strided_slice %62 {offsets = [0, 0], sizes = [16, 1], strides = [1, 1]} : vector<16x16xf32> to vector<16x1xf32>
    %64 = vector.extract_strided_slice %62 {offsets = [0, 0], sizes = [16, 15], strides = [1, 1]} : vector<16x16xf32> to vector<16x15xf32>
    %65 = tpu.concatenate %63, %64 in 1 : vector<16x1xf32>, vector<16x15xf32> -> vector<16x16xf32>
    %66 = vector.extract_strided_slice %62 {offsets = [0, 1], sizes = [16, 15], strides = [1, 1]} : vector<16x16xf32> to vector<16x15xf32>
    %67 = vector.extract_strided_slice %62 {offsets = [0, 15], sizes = [16, 1], strides = [1, 1]} : vector<16x16xf32> to vector<16x1xf32>
    %68 = tpu.concatenate %66, %67 in 1 : vector<16x15xf32>, vector<16x1xf32> -> vector<16x16xf32>
    %69 = arith.select %3, %68, %65 : vector<16x16xi1>, vector<16x16xf32>
    %70 = arith.select %5, %65, %68 : vector<16x16xi1>, vector<16x16xf32>
    %71 = arith.addf %69, %62 : vector<16x16xf32>
    %72 = arith.addf %71, %70 : vector<16x16xf32>
    %73 = vector.extract_strided_slice %72 {offsets = [0, 0], sizes = [1, 16], strides = [1, 1]} : vector<16x16xf32> to vector<1x16xf32>
    %74 = vector.extract_strided_slice %72 {offsets = [0, 0], sizes = [15, 16], strides = [1, 1]} : vector<16x16xf32> to vector<15x16xf32>
    %75 = tpu.concatenate %73, %74 in 0 : vector<1x16xf32>, vector<15x16xf32> -> vector<16x16xf32>
    %76 = vector.extract_strided_slice %72 {offsets = [1, 0], sizes = [15, 16], strides = [1, 1]} : vector<16x16xf32> to vector<15x16xf32>
    %77 = vector.extract_strided_slice %72 {offsets = [15, 0], sizes = [1, 16], strides = [1, 1]} : vector<16x16xf32> to vector<1x16xf32>
    %78 = tpu.concatenate %76, %77 in 0 : vector<15x16xf32>, vector<1x16xf32> -> vector<16x16xf32>
    %79 = arith.select %7, %78, %75 : vector<16x16xi1>, vector<16x16xf32>
    %80 = arith.select %9, %75, %78 : vector<16x16xi1>, vector<16x16xf32>
    %81 = arith.addf %79, %72 : vector<16x16xf32>
    %82 = arith.addf %81, %80 : vector<16x16xf32>
    %cst_14 = arith.constant 0.111111112 : f32
    %83 = vector.broadcast %cst_14 : f32 to vector<16x16xf32>
    %84 = arith.mulf %82, %83 : vector<16x16xf32>
    %85 = arith.mulf %39, %39 : vector<16x16xf32>
    %86 = arith.subf %84, %85 : vector<16x16xf32>
    %87 = arith.mulf %13, %13 : vector<16x16xf32>
    %88 = vector.extract_strided_slice %87 {offsets = [0, 0], sizes = [16, 1], strides = [1, 1]} : vector<16x16xf32> to vector<16x1xf32>
    %89 = vector.extract_strided_slice %87 {offsets = [0, 0], sizes = [16, 15], strides = [1, 1]} : vector<16x16xf32> to vector<16x15xf32>
    %90 = tpu.concatenate %88, %89 in 1 : vector<16x1xf32>, vector<16x15xf32> -> vector<16x16xf32>
    %91 = vector.extract_strided_slice %87 {offsets = [0, 1], sizes = [16, 15], strides = [1, 1]} : vector<16x16xf32> to vector<16x15xf32>
    %92 = vector.extract_strided_slice %87 {offsets = [0, 15], sizes = [16, 1], strides = [1, 1]} : vector<16x16xf32> to vector<16x1xf32>
    %93 = tpu.concatenate %91, %92 in 1 : vector<16x15xf32>, vector<16x1xf32> -> vector<16x16xf32>
    %94 = arith.select %3, %93, %90 : vector<16x16xi1>, vector<16x16xf32>
    %95 = arith.select %5, %90, %93 : vector<16x16xi1>, vector<16x16xf32>
    %96 = arith.addf %94, %87 : vector<16x16xf32>
    %97 = arith.addf %96, %95 : vector<16x16xf32>
    %98 = vector.extract_strided_slice %97 {offsets = [0, 0], sizes = [1, 16], strides = [1, 1]} : vector<16x16xf32> to vector<1x16xf32>
    %99 = vector.extract_strided_slice %97 {offsets = [0, 0], sizes = [15, 16], strides = [1, 1]} : vector<16x16xf32> to vector<15x16xf32>
    %100 = tpu.concatenate %98, %99 in 0 : vector<1x16xf32>, vector<15x16xf32> -> vector<16x16xf32>
    %101 = vector.extract_strided_slice %97 {offsets = [1, 0], sizes = [15, 16], strides = [1, 1]} : vector<16x16xf32> to vector<15x16xf32>
    %102 = vector.extract_strided_slice %97 {offsets = [15, 0], sizes = [1, 16], strides = [1, 1]} : vector<16x16xf32> to vector<1x16xf32>
    %103 = tpu.concatenate %101, %102 in 0 : vector<15x16xf32>, vector<1x16xf32> -> vector<16x16xf32>
    %104 = arith.select %7, %103, %100 : vector<16x16xi1>, vector<16x16xf32>
    %105 = arith.select %9, %100, %103 : vector<16x16xi1>, vector<16x16xf32>
    %106 = arith.addf %104, %97 : vector<16x16xf32>
    %107 = arith.addf %106, %105 : vector<16x16xf32>
    %cst_15 = arith.constant 0.111111112 : f32
    %108 = vector.broadcast %cst_15 : f32 to vector<16x16xf32>
    %109 = arith.mulf %107, %108 : vector<16x16xf32>
    %110 = arith.mulf %61, %61 : vector<16x16xf32>
    %111 = arith.subf %109, %110 : vector<16x16xf32>
    %112 = arith.mulf %11, %13 : vector<16x16xf32>
    %113 = vector.extract_strided_slice %112 {offsets = [0, 0], sizes = [16, 1], strides = [1, 1]} : vector<16x16xf32> to vector<16x1xf32>
    %114 = vector.extract_strided_slice %112 {offsets = [0, 0], sizes = [16, 15], strides = [1, 1]} : vector<16x16xf32> to vector<16x15xf32>
    %115 = tpu.concatenate %113, %114 in 1 : vector<16x1xf32>, vector<16x15xf32> -> vector<16x16xf32>
    %116 = vector.extract_strided_slice %112 {offsets = [0, 1], sizes = [16, 15], strides = [1, 1]} : vector<16x16xf32> to vector<16x15xf32>
    %117 = vector.extract_strided_slice %112 {offsets = [0, 15], sizes = [16, 1], strides = [1, 1]} : vector<16x16xf32> to vector<16x1xf32>
    %118 = tpu.concatenate %116, %117 in 1 : vector<16x15xf32>, vector<16x1xf32> -> vector<16x16xf32>
    %119 = arith.select %3, %118, %115 : vector<16x16xi1>, vector<16x16xf32>
    %120 = arith.select %5, %115, %118 : vector<16x16xi1>, vector<16x16xf32>
    %121 = arith.addf %119, %112 : vector<16x16xf32>
    %122 = arith.addf %121, %120 : vector<16x16xf32>
    %123 = vector.extract_strided_slice %122 {offsets = [0, 0], sizes = [1, 16], strides = [1, 1]} : vector<16x16xf32> to vector<1x16xf32>
    %124 = vector.extract_strided_slice %122 {offsets = [0, 0], sizes = [15, 16], strides = [1, 1]} : vector<16x16xf32> to vector<15x16xf32>
    %125 = tpu.concatenate %123, %124 in 0 : vector<1x16xf32>, vector<15x16xf32> -> vector<16x16xf32>
    %126 = vector.extract_strided_slice %122 {offsets = [1, 0], sizes = [15, 16], strides = [1, 1]} : vector<16x16xf32> to vector<15x16xf32>
    %127 = vector.extract_strided_slice %122 {offsets = [15, 0], sizes = [1, 16], strides = [1, 1]} : vector<16x16xf32> to vector<1x16xf32>
    %128 = tpu.concatenate %126, %127 in 0 : vector<15x16xf32>, vector<1x16xf32> -> vector<16x16xf32>
    %129 = arith.select %7, %128, %125 : vector<16x16xi1>, vector<16x16xf32>
    %130 = arith.select %9, %125, %128 : vector<16x16xi1>, vector<16x16xf32>
    %131 = arith.addf %129, %122 : vector<16x16xf32>
    %132 = arith.addf %131, %130 : vector<16x16xf32>
    %cst_16 = arith.constant 0.111111112 : f32
    %133 = vector.broadcast %cst_16 : f32 to vector<16x16xf32>
    %134 = arith.mulf %132, %133 : vector<16x16xf32>
    %135 = arith.mulf %39, %61 : vector<16x16xf32>
    %136 = arith.subf %134, %135 : vector<16x16xf32>
    %cst_17 = arith.constant 2.000000e+00 : f32
    %137 = vector.broadcast %cst_17 : f32 to vector<16x16xf32>
    %138 = arith.mulf %137, %39 : vector<16x16xf32>
    %139 = arith.mulf %138, %61 : vector<16x16xf32>
    %cst_18 = arith.constant 9.99999974E-5 : f32
    %140 = vector.broadcast %cst_18 : f32 to vector<16x16xf32>
    %141 = arith.addf %139, %140 : vector<16x16xf32>
    %cst_19 = arith.constant 2.000000e+00 : f32
    %142 = vector.broadcast %cst_19 : f32 to vector<16x16xf32>
    %143 = arith.mulf %142, %136 : vector<16x16xf32>
    %cst_20 = arith.constant 8.99999984E-4 : f32
    %144 = vector.broadcast %cst_20 : f32 to vector<16x16xf32>
    %145 = arith.addf %143, %144 : vector<16x16xf32>
    %146 = arith.mulf %141, %145 : vector<16x16xf32>
    %147 = arith.mulf %39, %39 : vector<16x16xf32>
    %148 = arith.mulf %61, %61 : vector<16x16xf32>
    %149 = arith.addf %147, %148 : vector<16x16xf32>
    %cst_21 = arith.constant 9.99999974E-5 : f32
    %150 = vector.broadcast %cst_21 : f32 to vector<16x16xf32>
    %151 = arith.addf %149, %150 : vector<16x16xf32>
    %152 = arith.addf %86, %111 : vector<16x16xf32>
    %cst_22 = arith.constant 8.99999984E-4 : f32
    %153 = vector.broadcast %cst_22 : f32 to vector<16x16xf32>
    %154 = arith.addf %152, %153 : vector<16x16xf32>
    %155 = arith.mulf %151, %154 : vector<16x16xf32>
    %156 = arith.divf %146, %155 : vector<16x16xf32>
    %cst_23 = arith.constant 1.000000e+00 : f32
    %157 = vector.broadcast %cst_23 : f32 to vector<16x16xf32>
    %158 = arith.subf %157, %156 : vector<16x16xf32>
    %cst_24 = arith.constant 5.000000e-01 : f32
    %159 = vector.broadcast %cst_24 : f32 to vector<16x16xf32>
    %160 = arith.mulf %158, %159 : vector<16x16xf32>
    %cst_25 = arith.constant 0.000000e+00 : f32
    %cst_26 = arith.constant 1.000000e+00 : f32
    %161 = vector.broadcast %cst_25 : f32 to vector<16x16xf32>
    %162 = arith.maximumf %161, %160 : vector<16x16xf32>
    %163 = vector.broadcast %cst_26 : f32 to vector<16x16xf32>
    %164 = arith.minimumf %163, %162 : vector<16x16xf32>
    %cst_27 = arith.constant 1.500000e-01 : f32
    %165 = vector.broadcast %cst_27 : f32 to vector<16x16xf32>
    %166 = arith.mulf %165, %17 : vector<16x16xf32>
    %cst_28 = arith.constant 8.500000e-01 : f32
    %167 = vector.broadcast %cst_28 : f32 to vector<16x16xf32>
    %168 = arith.mulf %167, %164 : vector<16x16xf32>
    %169 = arith.addf %166, %168 : vector<16x16xf32>
    %170 = arith.mulf %169, %15 : vector<16x16xf32>
    %171 = vector.shape_cast %170 : vector<16x16xf32> to vector<1x16x16xf32>
    %cst_29 = arith.constant dense<0.000000e+00> : vector<1xf32>
    %172 = vector.multi_reduction <add>, %171, %cst_29 [1, 2] : vector<1x16x16xf32> to vector<1xf32>
    %173 = vector.shape_cast %172 : vector<1xf32> to vector<1x1x1xf32>
    %174 = vector.extract %173[0, 0, 0] : f32 from vector<1x1x1xf32>
    %175 = vector.broadcast %174 : f32 to vector<1x1xf32>
    %c0_30 = arith.constant 0 : index
    %c0_31 = arith.constant 0 : index
    %c0_32 = arith.constant 0 : index
    %c0_33 = arith.constant 0 : index
    %176 = vector.load %arg8[%c0_30, %c0_31, %c0_32, %c0_33] : memref<1x1x16x16xf32, #tpu.memory_space<vmem>>, vector<1x1x16x16xf32>
    %177 = vector.shape_cast %176 : vector<1x1x16x16xf32> to vector<16x16xf32>
    %c0_34 = arith.constant 0 : index
    %c0_35 = arith.constant 0 : index
    %c0_36 = arith.constant 0 : index
    %c0_37 = arith.constant 0 : index
    %178 = vector.load %arg9[%c0_34, %c0_35, %c0_36, %c0_37] : memref<1x1x16x16xf32, #tpu.memory_space<vmem>>, vector<1x1x16x16xf32>
    %179 = vector.shape_cast %178 : vector<1x1x16x16xf32> to vector<16x16xf32>
    %c0_38 = arith.constant 0 : index
    %c0_39 = arith.constant 0 : index
    %c0_40 = arith.constant 0 : index
    %c0_41 = arith.constant 0 : index
    %180 = vector.load %arg10[%c0_38, %c0_39, %c0_40, %c0_41] : memref<1x1x16x16xf32, #tpu.memory_space<vmem>>, vector<1x1x16x16xf32>
    %181 = vector.shape_cast %180 : vector<1x1x16x16xf32> to vector<16x16xf32>
    %182 = arith.subf %177, %179 : vector<16x16xf32>
    %183 = math.absf %182 : vector<16x16xf32>
    %184 = vector.extract_strided_slice %177 {offsets = [0, 0], sizes = [16, 1], strides = [1, 1]} : vector<16x16xf32> to vector<16x1xf32>
    %185 = vector.extract_strided_slice %177 {offsets = [0, 0], sizes = [16, 15], strides = [1, 1]} : vector<16x16xf32> to vector<16x15xf32>
    %186 = tpu.concatenate %184, %185 in 1 : vector<16x1xf32>, vector<16x15xf32> -> vector<16x16xf32>
    %187 = vector.extract_strided_slice %177 {offsets = [0, 1], sizes = [16, 15], strides = [1, 1]} : vector<16x16xf32> to vector<16x15xf32>
    %188 = vector.extract_strided_slice %177 {offsets = [0, 15], sizes = [16, 1], strides = [1, 1]} : vector<16x16xf32> to vector<16x1xf32>
    %189 = tpu.concatenate %187, %188 in 1 : vector<16x15xf32>, vector<16x1xf32> -> vector<16x16xf32>
    %190 = arith.select %3, %189, %186 : vector<16x16xi1>, vector<16x16xf32>
    %191 = arith.select %5, %186, %189 : vector<16x16xi1>, vector<16x16xf32>
    %192 = arith.addf %190, %177 : vector<16x16xf32>
    %193 = arith.addf %192, %191 : vector<16x16xf32>
    %194 = vector.extract_strided_slice %193 {offsets = [0, 0], sizes = [1, 16], strides = [1, 1]} : vector<16x16xf32> to vector<1x16xf32>
    %195 = vector.extract_strided_slice %193 {offsets = [0, 0], sizes = [15, 16], strides = [1, 1]} : vector<16x16xf32> to vector<15x16xf32>
    %196 = tpu.concatenate %194, %195 in 0 : vector<1x16xf32>, vector<15x16xf32> -> vector<16x16xf32>
    %197 = vector.extract_strided_slice %193 {offsets = [1, 0], sizes = [15, 16], strides = [1, 1]} : vector<16x16xf32> to vector<15x16xf32>
    %198 = vector.extract_strided_slice %193 {offsets = [15, 0], sizes = [1, 16], strides = [1, 1]} : vector<16x16xf32> to vector<1x16xf32>
    %199 = tpu.concatenate %197, %198 in 0 : vector<15x16xf32>, vector<1x16xf32> -> vector<16x16xf32>
    %200 = arith.select %7, %199, %196 : vector<16x16xi1>, vector<16x16xf32>
    %201 = arith.select %9, %196, %199 : vector<16x16xi1>, vector<16x16xf32>
    %202 = arith.addf %200, %193 : vector<16x16xf32>
    %203 = arith.addf %202, %201 : vector<16x16xf32>
    %cst_42 = arith.constant 0.111111112 : f32
    %204 = vector.broadcast %cst_42 : f32 to vector<16x16xf32>
    %205 = arith.mulf %203, %204 : vector<16x16xf32>
    %206 = vector.extract_strided_slice %179 {offsets = [0, 0], sizes = [16, 1], strides = [1, 1]} : vector<16x16xf32> to vector<16x1xf32>
    %207 = vector.extract_strided_slice %179 {offsets = [0, 0], sizes = [16, 15], strides = [1, 1]} : vector<16x16xf32> to vector<16x15xf32>
    %208 = tpu.concatenate %206, %207 in 1 : vector<16x1xf32>, vector<16x15xf32> -> vector<16x16xf32>
    %209 = vector.extract_strided_slice %179 {offsets = [0, 1], sizes = [16, 15], strides = [1, 1]} : vector<16x16xf32> to vector<16x15xf32>
    %210 = vector.extract_strided_slice %179 {offsets = [0, 15], sizes = [16, 1], strides = [1, 1]} : vector<16x16xf32> to vector<16x1xf32>
    %211 = tpu.concatenate %209, %210 in 1 : vector<16x15xf32>, vector<16x1xf32> -> vector<16x16xf32>
    %212 = arith.select %3, %211, %208 : vector<16x16xi1>, vector<16x16xf32>
    %213 = arith.select %5, %208, %211 : vector<16x16xi1>, vector<16x16xf32>
    %214 = arith.addf %212, %179 : vector<16x16xf32>
    %215 = arith.addf %214, %213 : vector<16x16xf32>
    %216 = vector.extract_strided_slice %215 {offsets = [0, 0], sizes = [1, 16], strides = [1, 1]} : vector<16x16xf32> to vector<1x16xf32>
    %217 = vector.extract_strided_slice %215 {offsets = [0, 0], sizes = [15, 16], strides = [1, 1]} : vector<16x16xf32> to vector<15x16xf32>
    %218 = tpu.concatenate %216, %217 in 0 : vector<1x16xf32>, vector<15x16xf32> -> vector<16x16xf32>
    %219 = vector.extract_strided_slice %215 {offsets = [1, 0], sizes = [15, 16], strides = [1, 1]} : vector<16x16xf32> to vector<15x16xf32>
    %220 = vector.extract_strided_slice %215 {offsets = [15, 0], sizes = [1, 16], strides = [1, 1]} : vector<16x16xf32> to vector<1x16xf32>
    %221 = tpu.concatenate %219, %220 in 0 : vector<15x16xf32>, vector<1x16xf32> -> vector<16x16xf32>
    %222 = arith.select %7, %221, %218 : vector<16x16xi1>, vector<16x16xf32>
    %223 = arith.select %9, %218, %221 : vector<16x16xi1>, vector<16x16xf32>
    %224 = arith.addf %222, %215 : vector<16x16xf32>
    %225 = arith.addf %224, %223 : vector<16x16xf32>
    %cst_43 = arith.constant 0.111111112 : f32
    %226 = vector.broadcast %cst_43 : f32 to vector<16x16xf32>
    %227 = arith.mulf %225, %226 : vector<16x16xf32>
    %228 = arith.mulf %177, %177 : vector<16x16xf32>
    %229 = vector.extract_strided_slice %228 {offsets = [0, 0], sizes = [16, 1], strides = [1, 1]} : vector<16x16xf32> to vector<16x1xf32>
    %230 = vector.extract_strided_slice %228 {offsets = [0, 0], sizes = [16, 15], strides = [1, 1]} : vector<16x16xf32> to vector<16x15xf32>
    %231 = tpu.concatenate %229, %230 in 1 : vector<16x1xf32>, vector<16x15xf32> -> vector<16x16xf32>
    %232 = vector.extract_strided_slice %228 {offsets = [0, 1], sizes = [16, 15], strides = [1, 1]} : vector<16x16xf32> to vector<16x15xf32>
    %233 = vector.extract_strided_slice %228 {offsets = [0, 15], sizes = [16, 1], strides = [1, 1]} : vector<16x16xf32> to vector<16x1xf32>
    %234 = tpu.concatenate %232, %233 in 1 : vector<16x15xf32>, vector<16x1xf32> -> vector<16x16xf32>
    %235 = arith.select %3, %234, %231 : vector<16x16xi1>, vector<16x16xf32>
    %236 = arith.select %5, %231, %234 : vector<16x16xi1>, vector<16x16xf32>
    %237 = arith.addf %235, %228 : vector<16x16xf32>
    %238 = arith.addf %237, %236 : vector<16x16xf32>
    %239 = vector.extract_strided_slice %238 {offsets = [0, 0], sizes = [1, 16], strides = [1, 1]} : vector<16x16xf32> to vector<1x16xf32>
    %240 = vector.extract_strided_slice %238 {offsets = [0, 0], sizes = [15, 16], strides = [1, 1]} : vector<16x16xf32> to vector<15x16xf32>
    %241 = tpu.concatenate %239, %240 in 0 : vector<1x16xf32>, vector<15x16xf32> -> vector<16x16xf32>
    %242 = vector.extract_strided_slice %238 {offsets = [1, 0], sizes = [15, 16], strides = [1, 1]} : vector<16x16xf32> to vector<15x16xf32>
    %243 = vector.extract_strided_slice %238 {offsets = [15, 0], sizes = [1, 16], strides = [1, 1]} : vector<16x16xf32> to vector<1x16xf32>
    %244 = tpu.concatenate %242, %243 in 0 : vector<15x16xf32>, vector<1x16xf32> -> vector<16x16xf32>
    %245 = arith.select %7, %244, %241 : vector<16x16xi1>, vector<16x16xf32>
    %246 = arith.select %9, %241, %244 : vector<16x16xi1>, vector<16x16xf32>
    %247 = arith.addf %245, %238 : vector<16x16xf32>
    %248 = arith.addf %247, %246 : vector<16x16xf32>
    %cst_44 = arith.constant 0.111111112 : f32
    %249 = vector.broadcast %cst_44 : f32 to vector<16x16xf32>
    %250 = arith.mulf %248, %249 : vector<16x16xf32>
    %251 = arith.mulf %205, %205 : vector<16x16xf32>
    %252 = arith.subf %250, %251 : vector<16x16xf32>
    %253 = arith.mulf %179, %179 : vector<16x16xf32>
    %254 = vector.extract_strided_slice %253 {offsets = [0, 0], sizes = [16, 1], strides = [1, 1]} : vector<16x16xf32> to vector<16x1xf32>
    %255 = vector.extract_strided_slice %253 {offsets = [0, 0], sizes = [16, 15], strides = [1, 1]} : vector<16x16xf32> to vector<16x15xf32>
    %256 = tpu.concatenate %254, %255 in 1 : vector<16x1xf32>, vector<16x15xf32> -> vector<16x16xf32>
    %257 = vector.extract_strided_slice %253 {offsets = [0, 1], sizes = [16, 15], strides = [1, 1]} : vector<16x16xf32> to vector<16x15xf32>
    %258 = vector.extract_strided_slice %253 {offsets = [0, 15], sizes = [16, 1], strides = [1, 1]} : vector<16x16xf32> to vector<16x1xf32>
    %259 = tpu.concatenate %257, %258 in 1 : vector<16x15xf32>, vector<16x1xf32> -> vector<16x16xf32>
    %260 = arith.select %3, %259, %256 : vector<16x16xi1>, vector<16x16xf32>
    %261 = arith.select %5, %256, %259 : vector<16x16xi1>, vector<16x16xf32>
    %262 = arith.addf %260, %253 : vector<16x16xf32>
    %263 = arith.addf %262, %261 : vector<16x16xf32>
    %264 = vector.extract_strided_slice %263 {offsets = [0, 0], sizes = [1, 16], strides = [1, 1]} : vector<16x16xf32> to vector<1x16xf32>
    %265 = vector.extract_strided_slice %263 {offsets = [0, 0], sizes = [15, 16], strides = [1, 1]} : vector<16x16xf32> to vector<15x16xf32>
    %266 = tpu.concatenate %264, %265 in 0 : vector<1x16xf32>, vector<15x16xf32> -> vector<16x16xf32>
    %267 = vector.extract_strided_slice %263 {offsets = [1, 0], sizes = [15, 16], strides = [1, 1]} : vector<16x16xf32> to vector<15x16xf32>
    %268 = vector.extract_strided_slice %263 {offsets = [15, 0], sizes = [1, 16], strides = [1, 1]} : vector<16x16xf32> to vector<1x16xf32>
    %269 = tpu.concatenate %267, %268 in 0 : vector<15x16xf32>, vector<1x16xf32> -> vector<16x16xf32>
    %270 = arith.select %7, %269, %266 : vector<16x16xi1>, vector<16x16xf32>
    %271 = arith.select %9, %266, %269 : vector<16x16xi1>, vector<16x16xf32>
    %272 = arith.addf %270, %263 : vector<16x16xf32>
    %273 = arith.addf %272, %271 : vector<16x16xf32>
    %cst_45 = arith.constant 0.111111112 : f32
    %274 = vector.broadcast %cst_45 : f32 to vector<16x16xf32>
    %275 = arith.mulf %273, %274 : vector<16x16xf32>
    %276 = arith.mulf %227, %227 : vector<16x16xf32>
    %277 = arith.subf %275, %276 : vector<16x16xf32>
    %278 = arith.mulf %177, %179 : vector<16x16xf32>
    %279 = vector.extract_strided_slice %278 {offsets = [0, 0], sizes = [16, 1], strides = [1, 1]} : vector<16x16xf32> to vector<16x1xf32>
    %280 = vector.extract_strided_slice %278 {offsets = [0, 0], sizes = [16, 15], strides = [1, 1]} : vector<16x16xf32> to vector<16x15xf32>
    %281 = tpu.concatenate %279, %280 in 1 : vector<16x1xf32>, vector<16x15xf32> -> vector<16x16xf32>
    %282 = vector.extract_strided_slice %278 {offsets = [0, 1], sizes = [16, 15], strides = [1, 1]} : vector<16x16xf32> to vector<16x15xf32>
    %283 = vector.extract_strided_slice %278 {offsets = [0, 15], sizes = [16, 1], strides = [1, 1]} : vector<16x16xf32> to vector<16x1xf32>
    %284 = tpu.concatenate %282, %283 in 1 : vector<16x15xf32>, vector<16x1xf32> -> vector<16x16xf32>
    %285 = arith.select %3, %284, %281 : vector<16x16xi1>, vector<16x16xf32>
    %286 = arith.select %5, %281, %284 : vector<16x16xi1>, vector<16x16xf32>
    %287 = arith.addf %285, %278 : vector<16x16xf32>
    %288 = arith.addf %287, %286 : vector<16x16xf32>
    %289 = vector.extract_strided_slice %288 {offsets = [0, 0], sizes = [1, 16], strides = [1, 1]} : vector<16x16xf32> to vector<1x16xf32>
    %290 = vector.extract_strided_slice %288 {offsets = [0, 0], sizes = [15, 16], strides = [1, 1]} : vector<16x16xf32> to vector<15x16xf32>
    %291 = tpu.concatenate %289, %290 in 0 : vector<1x16xf32>, vector<15x16xf32> -> vector<16x16xf32>
    %292 = vector.extract_strided_slice %288 {offsets = [1, 0], sizes = [15, 16], strides = [1, 1]} : vector<16x16xf32> to vector<15x16xf32>
    %293 = vector.extract_strided_slice %288 {offsets = [15, 0], sizes = [1, 16], strides = [1, 1]} : vector<16x16xf32> to vector<1x16xf32>
    %294 = tpu.concatenate %292, %293 in 0 : vector<15x16xf32>, vector<1x16xf32> -> vector<16x16xf32>
    %295 = arith.select %7, %294, %291 : vector<16x16xi1>, vector<16x16xf32>
    %296 = arith.select %9, %291, %294 : vector<16x16xi1>, vector<16x16xf32>
    %297 = arith.addf %295, %288 : vector<16x16xf32>
    %298 = arith.addf %297, %296 : vector<16x16xf32>
    %cst_46 = arith.constant 0.111111112 : f32
    %299 = vector.broadcast %cst_46 : f32 to vector<16x16xf32>
    %300 = arith.mulf %298, %299 : vector<16x16xf32>
    %301 = arith.mulf %205, %227 : vector<16x16xf32>
    %302 = arith.subf %300, %301 : vector<16x16xf32>
    %cst_47 = arith.constant 2.000000e+00 : f32
    %303 = vector.broadcast %cst_47 : f32 to vector<16x16xf32>
    %304 = arith.mulf %303, %205 : vector<16x16xf32>
    %305 = arith.mulf %304, %227 : vector<16x16xf32>
    %cst_48 = arith.constant 9.99999974E-5 : f32
    %306 = vector.broadcast %cst_48 : f32 to vector<16x16xf32>
    %307 = arith.addf %305, %306 : vector<16x16xf32>
    %cst_49 = arith.constant 2.000000e+00 : f32
    %308 = vector.broadcast %cst_49 : f32 to vector<16x16xf32>
    %309 = arith.mulf %308, %302 : vector<16x16xf32>
    %cst_50 = arith.constant 8.99999984E-4 : f32
    %310 = vector.broadcast %cst_50 : f32 to vector<16x16xf32>
    %311 = arith.addf %309, %310 : vector<16x16xf32>
    %312 = arith.mulf %307, %311 : vector<16x16xf32>
    %313 = arith.mulf %205, %205 : vector<16x16xf32>
    %314 = arith.mulf %227, %227 : vector<16x16xf32>
    %315 = arith.addf %313, %314 : vector<16x16xf32>
    %cst_51 = arith.constant 9.99999974E-5 : f32
    %316 = vector.broadcast %cst_51 : f32 to vector<16x16xf32>
    %317 = arith.addf %315, %316 : vector<16x16xf32>
    %318 = arith.addf %252, %277 : vector<16x16xf32>
    %cst_52 = arith.constant 8.99999984E-4 : f32
    %319 = vector.broadcast %cst_52 : f32 to vector<16x16xf32>
    %320 = arith.addf %318, %319 : vector<16x16xf32>
    %321 = arith.mulf %317, %320 : vector<16x16xf32>
    %322 = arith.divf %312, %321 : vector<16x16xf32>
    %cst_53 = arith.constant 1.000000e+00 : f32
    %323 = vector.broadcast %cst_53 : f32 to vector<16x16xf32>
    %324 = arith.subf %323, %322 : vector<16x16xf32>
    %cst_54 = arith.constant 5.000000e-01 : f32
    %325 = vector.broadcast %cst_54 : f32 to vector<16x16xf32>
    %326 = arith.mulf %324, %325 : vector<16x16xf32>
    %cst_55 = arith.constant 0.000000e+00 : f32
    %cst_56 = arith.constant 1.000000e+00 : f32
    %327 = vector.broadcast %cst_55 : f32 to vector<16x16xf32>
    %328 = arith.maximumf %327, %326 : vector<16x16xf32>
    %329 = vector.broadcast %cst_56 : f32 to vector<16x16xf32>
    %330 = arith.minimumf %329, %328 : vector<16x16xf32>
    %cst_57 = arith.constant 1.500000e-01 : f32
    %331 = vector.broadcast %cst_57 : f32 to vector<16x16xf32>
    %332 = arith.mulf %331, %183 : vector<16x16xf32>
    %cst_58 = arith.constant 8.500000e-01 : f32
    %333 = vector.broadcast %cst_58 : f32 to vector<16x16xf32>
    %334 = arith.mulf %333, %330 : vector<16x16xf32>
    %335 = arith.addf %332, %334 : vector<16x16xf32>
    %336 = arith.mulf %335, %181 : vector<16x16xf32>
    %337 = vector.shape_cast %336 : vector<16x16xf32> to vector<1x16x16xf32>
    %cst_59 = arith.constant dense<0.000000e+00> : vector<1xf32>
    %338 = vector.multi_reduction <add>, %337, %cst_59 [1, 2] : vector<1x16x16xf32> to vector<1xf32>
    %339 = vector.shape_cast %338 : vector<1xf32> to vector<1x1x1xf32>
    %340 = vector.extract %339[0, 0, 0] : f32 from vector<1x1x1xf32>
    %341 = vector.broadcast %340 : f32 to vector<1x1xf32>
    %c0_i32_60 = arith.constant 0 : i32
    %342 = arith.cmpi eq, %arg1, %c0_i32_60 : i32
    %343 = arith.extui %342 : i1 to i32
    %c0_i32_61 = arith.constant 0 : i32
    %344 = arith.cmpi ne, %343, %c0_i32_61 : i32
    scf.if %344 {
      %c0_64 = arith.constant 0 : index
      %c0_65 = arith.constant 0 : index
      %c0_66 = arith.constant 0 : index
      %c0_67 = arith.constant 0 : index
      %348 = vector.load %arg4[%c0_64, %c0_65, %c0_66, %c0_67] : memref<1x1x16x16xf32, #tpu.memory_space<vmem>>, vector<1x1x16x16xf32>
      %349 = vector.shape_cast %348 : vector<1x1x16x16xf32> to vector<16x16xf32>
      %c0_68 = arith.constant 0 : index
      %c0_69 = arith.constant 0 : index
      %c0_70 = arith.constant 0 : index
      %c0_71 = arith.constant 0 : index
      %350 = vector.load %arg5[%c0_68, %c0_69, %c0_70, %c0_71] : memref<1x1x16x16xf32, #tpu.memory_space<vmem>>, vector<1x1x16x16xf32>
      %351 = vector.shape_cast %350 : vector<1x1x16x16xf32> to vector<16x16xf32>
      %c0_72 = arith.constant 0 : index
      %c0_73 = arith.constant 0 : index
      %c0_74 = arith.constant 0 : index
      %c0_75 = arith.constant 0 : index
      %352 = vector.load %arg6[%c0_72, %c0_73, %c0_74, %c0_75] : memref<1x1x16x16xf32, #tpu.memory_space<vmem>>, vector<1x1x16x16xf32>
      %353 = vector.shape_cast %352 : vector<1x1x16x16xf32> to vector<16x16xf32>
      %354 = arith.subf %353, %351 : vector<16x16xf32>
      %355 = math.absf %354 : vector<16x16xf32>
      %356 = arith.addf %353, %351 : vector<16x16xf32>
      %357 = math.absf %356 : vector<16x16xf32>
      %358 = arith.divf %355, %357 : vector<16x16xf32>
      %cst_76 = arith.constant 0.000000e+00 : f32
      %cst_77 = arith.constant 1.000000e+00 : f32
      %359 = vector.broadcast %cst_76 : f32 to vector<16x16xf32>
      %360 = arith.maximumf %359, %358 : vector<16x16xf32>
      %361 = vector.broadcast %cst_77 : f32 to vector<16x16xf32>
      %362 = arith.minimumf %361, %360 : vector<16x16xf32>
      %363 = arith.mulf %362, %349 : vector<16x16xf32>
      %c0_78 = arith.constant 0 : index
      %c0_79 = arith.constant 0 : index
      %c0_80 = arith.constant 0 : index
      %364 = vector.load %arg7[%c0_78, %c0_79, %c0_80] : memref<1x16x16xf32, #tpu.memory_space<vmem>>, vector<1x16x16xf32>
      %365 = vector.shape_cast %364 : vector<1x16x16xf32> to vector<16x16xf32>
      %366 = arith.mulf %365, %349 : vector<16x16xf32>
      %367 = vector.shape_cast %363 : vector<16x16xf32> to vector<1x16x16xf32>
      %cst_81 = arith.constant dense<0.000000e+00> : vector<1xf32>
      %368 = vector.multi_reduction <add>, %367, %cst_81 [1, 2] : vector<1x16x16xf32> to vector<1xf32>
      %369 = vector.shape_cast %368 : vector<1xf32> to vector<1x1x1xf32>
      %370 = vector.extract %369[0, 0, 0] : f32 from vector<1x1x1xf32>
      %371 = vector.broadcast %370 : f32 to vector<1x1xf32>
      %372 = vector.shape_cast %366 : vector<16x16xf32> to vector<1x16x16xf32>
      %cst_82 = arith.constant dense<0.000000e+00> : vector<1xf32>
      %373 = vector.multi_reduction <add>, %372, %cst_82 [1, 2] : vector<1x16x16xf32> to vector<1xf32>
      %374 = vector.shape_cast %373 : vector<1xf32> to vector<1x1x1xf32>
      %375 = vector.extract %374[0, 0, 0] : f32 from vector<1x1x1xf32>
      %376 = vector.broadcast %375 : f32 to vector<1x1xf32>
      %377 = vector.shape_cast %349 : vector<16x16xf32> to vector<1x16x16xf32>
      %cst_83 = arith.constant dense<0.000000e+00> : vector<1xf32>
      %378 = vector.multi_reduction <add>, %377, %cst_83 [1, 2] : vector<1x16x16xf32> to vector<1xf32>
      %379 = vector.shape_cast %378 : vector<1xf32> to vector<1x1x1xf32>
      %380 = vector.extract %379[0, 0, 0] : f32 from vector<1x1x1xf32>
      %381 = vector.broadcast %380 : f32 to vector<1x1xf32>
      %c0_84 = arith.constant 0 : index
      %c0_85 = arith.constant 0 : index
      %c0_86 = arith.constant 0 : index
      %c0_87 = arith.constant 0 : index
      %382 = vector.load %arg10[%c0_84, %c0_85, %c0_86, %c0_87] : memref<1x1x16x16xf32, #tpu.memory_space<vmem>>, vector<1x1x16x16xf32>
      %383 = vector.shape_cast %382 : vector<1x1x16x16xf32> to vector<16x16xf32>
      %c0_88 = arith.constant 0 : index
      %c0_89 = arith.constant 0 : index
      %c0_90 = arith.constant 0 : index
      %c0_91 = arith.constant 0 : index
      %384 = vector.load %arg11[%c0_88, %c0_89, %c0_90, %c0_91] : memref<1x1x16x16xf32, #tpu.memory_space<vmem>>, vector<1x1x16x16xf32>
      %385 = vector.shape_cast %384 : vector<1x1x16x16xf32> to vector<16x16xf32>
      %c0_92 = arith.constant 0 : index
      %c0_93 = arith.constant 0 : index
      %c0_94 = arith.constant 0 : index
      %c0_95 = arith.constant 0 : index
      %386 = vector.load %arg12[%c0_92, %c0_93, %c0_94, %c0_95] : memref<1x1x16x16xf32, #tpu.memory_space<vmem>>, vector<1x1x16x16xf32>
      %387 = vector.shape_cast %386 : vector<1x1x16x16xf32> to vector<16x16xf32>
      %388 = arith.subf %387, %385 : vector<16x16xf32>
      %389 = math.absf %388 : vector<16x16xf32>
      %390 = arith.addf %387, %385 : vector<16x16xf32>
      %391 = math.absf %390 : vector<16x16xf32>
      %392 = arith.divf %389, %391 : vector<16x16xf32>
      %cst_96 = arith.constant 0.000000e+00 : f32
      %cst_97 = arith.constant 1.000000e+00 : f32
      %393 = vector.broadcast %cst_96 : f32 to vector<16x16xf32>
      %394 = arith.maximumf %393, %392 : vector<16x16xf32>
      %395 = vector.broadcast %cst_97 : f32 to vector<16x16xf32>
      %396 = arith.minimumf %395, %394 : vector<16x16xf32>
      %397 = arith.mulf %396, %383 : vector<16x16xf32>
      %c0_98 = arith.constant 0 : index
      %c0_99 = arith.constant 0 : index
      %c0_100 = arith.constant 0 : index
      %398 = vector.load %arg13[%c0_98, %c0_99, %c0_100] : memref<1x16x16xf32, #tpu.memory_space<vmem>>, vector<1x16x16xf32>
      %399 = vector.shape_cast %398 : vector<1x16x16xf32> to vector<16x16xf32>
      %400 = arith.mulf %399, %383 : vector<16x16xf32>
      %401 = vector.shape_cast %397 : vector<16x16xf32> to vector<1x16x16xf32>
      %cst_101 = arith.constant dense<0.000000e+00> : vector<1xf32>
      %402 = vector.multi_reduction <add>, %401, %cst_101 [1, 2] : vector<1x16x16xf32> to vector<1xf32>
      %403 = vector.shape_cast %402 : vector<1xf32> to vector<1x1x1xf32>
      %404 = vector.extract %403[0, 0, 0] : f32 from vector<1x1x1xf32>
      %405 = vector.broadcast %404 : f32 to vector<1x1xf32>
      %406 = vector.shape_cast %400 : vector<16x16xf32> to vector<1x16x16xf32>
      %cst_102 = arith.constant dense<0.000000e+00> : vector<1xf32>
      %407 = vector.multi_reduction <add>, %406, %cst_102 [1, 2] : vector<1x16x16xf32> to vector<1xf32>
      %408 = vector.shape_cast %407 : vector<1xf32> to vector<1x1x1xf32>
      %409 = vector.extract %408[0, 0, 0] : f32 from vector<1x1x1xf32>
      %410 = vector.broadcast %409 : f32 to vector<1x1xf32>
      %411 = vector.shape_cast %383 : vector<16x16xf32> to vector<1x16x16xf32>
      %cst_103 = arith.constant dense<0.000000e+00> : vector<1xf32>
      %412 = vector.multi_reduction <add>, %411, %cst_103 [1, 2] : vector<1x16x16xf32> to vector<1xf32>
      %413 = vector.shape_cast %412 : vector<1xf32> to vector<1x1x1xf32>
      %414 = vector.extract %413[0, 0, 0] : f32 from vector<1x1x1xf32>
      %415 = vector.broadcast %414 : f32 to vector<1x1xf32>
      %cst_104 = arith.constant 0.000000e+00 : f32
      %416 = vector.broadcast %cst_104 : f32 to vector<1x120xf32>
      %417 = tpu.concatenate %175, %371, %376, %381, %341, %405, %410, %415, %416 in 1 : vector<1x1xf32>, vector<1x1xf32>, vector<1x1xf32>, vector<1x1xf32>, vector<1x1xf32>, vector<1x1xf32>, vector<1x1xf32>, vector<1x1xf32>, vector<1x120xf32> -> vector<1x128xf32>
      %c0_105 = arith.constant 0 : index
      %c0_106 = arith.constant 0 : index
      %c0_107 = arith.constant 0 : index
      %418 = vector.load %arg14[%c0_105, %c0_106, %c0_107] : memref<1x1x128xf32, #tpu.memory_space<vmem>>, vector<1x1x128xf32>
      %419 = vector.shape_cast %418 : vector<1x1x128xf32> to vector<1x128xf32>
      %420 = vector.shape_cast %417 : vector<1x128xf32> to vector<1x1x128xf32>
      tpu.vector_store %arg14[%c0_105, %c0_106, %c0_107], %420 {strides = array<i32>} : memref<1x1x128xf32, #tpu.memory_space<vmem>>, vector<1x1x128xf32>,
      %cst_108 = arith.constant 0.333333343 : f32
      %421 = vector.broadcast %cst_108 : f32 to vector<16x16xf32>
      %422 = arith.mulf %170, %421 : vector<16x16xf32>
      %c0_109 = arith.constant 0 : index
      %c0_110 = arith.constant 0 : index
      %c0_111 = arith.constant 0 : index
      %c0_112 = arith.constant 0 : index
      %423 = vector.load %arg15[%c0_109, %c0_110, %c0_111, %c0_112] : memref<1x1x16x16xf32, #tpu.memory_space<vmem>>, vector<1x1x16x16xf32>
      %424 = vector.shape_cast %423 : vector<1x1x16x16xf32> to vector<16x16xf32>
      %425 = vector.shape_cast %422 : vector<16x16xf32> to vector<1x1x16x16xf32>
      tpu.vector_store %arg15[%c0_109, %c0_110, %c0_111, %c0_112], %425 {strides = array<i32>} : memref<1x1x16x16xf32, #tpu.memory_space<vmem>>, vector<1x1x16x16xf32>,
    } else {
    }
    %c0_i32_62 = arith.constant 0 : i32
    %345 = arith.cmpi sgt, %arg1, %c0_i32_62 : i32
    %346 = arith.extui %345 : i1 to i32
    %c0_i32_63 = arith.constant 0 : i32
    %347 = arith.cmpi ne, %346, %c0_i32_63 : i32
    scf.if %347 {
      %cst_64 = arith.constant 0.000000e+00 : f32
      %348 = vector.broadcast %cst_64 : f32 to vector<1x3xf32>
      %cst_65 = arith.constant 0.000000e+00 : f32
      %349 = vector.broadcast %cst_65 : f32 to vector<1x123xf32>
      %c0_66 = arith.constant 0 : index
      %c0_67 = arith.constant 0 : index
      %c0_68 = arith.constant 0 : index
      %350 = vector.load %arg14[%c0_66, %c0_67, %c0_68] : memref<1x1x128xf32, #tpu.memory_space<vmem>>, vector<1x1x128xf32>
      %351 = vector.shape_cast %350 : vector<1x1x128xf32> to vector<1x128xf32>
      %352 = tpu.concatenate %175, %348, %341, %349 in 1 : vector<1x1xf32>, vector<1x3xf32>, vector<1x1xf32>, vector<1x123xf32> -> vector<1x128xf32>
      %353 = arith.addf %351, %352 : vector<1x128xf32>
      %c0_69 = arith.constant 0 : index
      %c0_70 = arith.constant 0 : index
      %c0_71 = arith.constant 0 : index
      %354 = vector.load %arg14[%c0_69, %c0_70, %c0_71] : memref<1x1x128xf32, #tpu.memory_space<vmem>>, vector<1x1x128xf32>
      %355 = vector.shape_cast %354 : vector<1x1x128xf32> to vector<1x128xf32>
      %356 = vector.shape_cast %353 : vector<1x128xf32> to vector<1x1x128xf32>
      tpu.vector_store %arg14[%c0_69, %c0_70, %c0_71], %356 {strides = array<i32>} : memref<1x1x128xf32, #tpu.memory_space<vmem>>, vector<1x1x128xf32>,
      %c0_72 = arith.constant 0 : index
      %c0_73 = arith.constant 0 : index
      %c0_74 = arith.constant 0 : index
      %c0_75 = arith.constant 0 : index
      %357 = vector.load %arg15[%c0_72, %c0_73, %c0_74, %c0_75] : memref<1x1x16x16xf32, #tpu.memory_space<vmem>>, vector<1x1x16x16xf32>
      %358 = vector.shape_cast %357 : vector<1x1x16x16xf32> to vector<16x16xf32>
      %cst_76 = arith.constant 0.333333343 : f32
      %359 = vector.broadcast %cst_76 : f32 to vector<16x16xf32>
      %360 = arith.mulf %170, %359 : vector<16x16xf32>
      %361 = arith.addf %358, %360 : vector<16x16xf32>
      %c0_77 = arith.constant 0 : index
      %c0_78 = arith.constant 0 : index
      %c0_79 = arith.constant 0 : index
      %c0_80 = arith.constant 0 : index
      %362 = vector.load %arg15[%c0_77, %c0_78, %c0_79, %c0_80] : memref<1x1x16x16xf32, #tpu.memory_space<vmem>>, vector<1x1x16x16xf32>
      %363 = vector.shape_cast %362 : vector<1x1x16x16xf32> to vector<16x16xf32>
      %364 = vector.shape_cast %361 : vector<16x16xf32> to vector<1x1x16x16xf32>
      tpu.vector_store %arg15[%c0_77, %c0_78, %c0_79, %c0_80], %364 {strides = array<i32>} : memref<1x1x16x16xf32, #tpu.memory_space<vmem>>, vector<1x1x16x16xf32>,
    } else {
    }
    return
  }
  func.func @transform_0(%arg0: i32, %arg1: i32) -> (i32, i32, i32, i32) {
    %c0_i32 = arith.constant 0 : i32
    %c0_i32_0 = arith.constant 0 : i32
    %c0_i32_1 = arith.constant 0 : i32
    return %arg0, %arg1, %c0_i32, %c0_i32_0 : i32, i32, i32, i32
  }
  func.func @transform_1(%arg0: i32, %arg1: i32) -> (i32, i32, i32, i32) {
    %c0_i32 = arith.constant 0 : i32
    %c0_i32_0 = arith.constant 0 : i32
    %c0_i32_1 = arith.constant 0 : i32
    return %arg0, %arg1, %c0_i32, %c0_i32_0 : i32, i32, i32, i32
  }
  func.func @transform_2(%arg0: i32, %arg1: i32) -> (i32, i32, i32, i32) {
    %c0_i32 = arith.constant 0 : i32
    %c0_i32_0 = arith.constant 0 : i32
    %c0_i32_1 = arith.constant 0 : i32
    %c0_i32_2 = arith.constant 0 : i32
    return %arg0, %c0_i32, %c0_i32_0, %c0_i32_1 : i32, i32, i32, i32
  }
  func.func @transform_3(%arg0: i32, %arg1: i32) -> (i32, i32, i32, i32) {
    %c0_i32 = arith.constant 0 : i32
    %c0_i32_0 = arith.constant 0 : i32
    %c0_i32_1 = arith.constant 0 : i32
    %c0_i32_2 = arith.constant 0 : i32
    return %arg0, %c0_i32, %c0_i32_0, %c0_i32_1 : i32, i32, i32, i32
  }
  func.func @transform_4(%arg0: i32, %arg1: i32) -> (i32, i32, i32, i32) {
    %c0_i32 = arith.constant 0 : i32
    %c0_i32_0 = arith.constant 0 : i32
    %c0_i32_1 = arith.constant 0 : i32
    %c0_i32_2 = arith.constant 0 : i32
    return %arg0, %c0_i32, %c0_i32_0, %c0_i32_1 : i32, i32, i32, i32
  }
  func.func @transform_5(%arg0: i32, %arg1: i32) -> (i32, i32, i32) {
    %c0_i32 = arith.constant 0 : i32
    %c0_i32_0 = arith.constant 0 : i32
    %c0_i32_1 = arith.constant 0 : i32
    return %arg0, %c0_i32, %c0_i32_0 : i32, i32, i32
  }
  func.func @transform_6(%arg0: i32, %arg1: i32) -> (i32, i32, i32, i32) {
    %c0_i32 = arith.constant 0 : i32
    %c0_i32_0 = arith.constant 0 : i32
    %c0_i32_1 = arith.constant 0 : i32
    return %arg0, %arg1, %c0_i32, %c0_i32_0 : i32, i32, i32, i32
  }
  func.func @transform_7(%arg0: i32, %arg1: i32) -> (i32, i32, i32, i32) {
    %c0_i32 = arith.constant 0 : i32
    %c0_i32_0 = arith.constant 0 : i32
    %c0_i32_1 = arith.constant 0 : i32
    return %arg0, %arg1, %c0_i32, %c0_i32_0 : i32, i32, i32, i32
  }
  func.func @transform_8(%arg0: i32, %arg1: i32) -> (i32, i32, i32, i32) {
    %c0_i32 = arith.constant 0 : i32
    %c0_i32_0 = arith.constant 0 : i32
    %c0_i32_1 = arith.constant 0 : i32
    %c0_i32_2 = arith.constant 0 : i32
    return %arg0, %c0_i32, %c0_i32_0, %c0_i32_1 : i32, i32, i32, i32
  }
  func.func @transform_9(%arg0: i32, %arg1: i32) -> (i32, i32, i32, i32) {
    %c0_i32 = arith.constant 0 : i32
    %c0_i32_0 = arith.constant 0 : i32
    %c0_i32_1 = arith.constant 0 : i32
    %c0_i32_2 = arith.constant 0 : i32
    return %arg0, %c0_i32, %c0_i32_0, %c0_i32_1 : i32, i32, i32, i32
  }
  func.func @transform_10(%arg0: i32, %arg1: i32) -> (i32, i32, i32, i32) {
    %c0_i32 = arith.constant 0 : i32
    %c0_i32_0 = arith.constant 0 : i32
    %c0_i32_1 = arith.constant 0 : i32
    %c0_i32_2 = arith.constant 0 : i32
    return %arg0, %c0_i32, %c0_i32_0, %c0_i32_1 : i32, i32, i32, i32
  }
  func.func @transform_11(%arg0: i32, %arg1: i32) -> (i32, i32, i32) {
    %c0_i32 = arith.constant 0 : i32
    %c0_i32_0 = arith.constant 0 : i32
    %c0_i32_1 = arith.constant 0 : i32
    return %arg0, %c0_i32, %c0_i32_0 : i32, i32, i32
  }
  func.func @transform_12(%arg0: i32, %arg1: i32) -> (i32, i32, i32) {
    %c0_i32 = arith.constant 0 : i32
    %c0_i32_0 = arith.constant 0 : i32
    %c0_i32_1 = arith.constant 0 : i32
    return %arg0, %c0_i32, %c0_i32_0 : i32, i32, i32
  }
  func.func @transform_13(%arg0: i32, %arg1: i32) -> (i32, i32, i32, i32) {
    %c0_i32 = arith.constant 0 : i32
    %c0_i32_0 = arith.constant 0 : i32
    %c0_i32_1 = arith.constant 0 : i32
    %c0_i32_2 = arith.constant 0 : i32
    return %arg0, %c0_i32, %c0_i32_0, %c0_i32_1 : i32, i32, i32, i32
  }
}

</mosaic_0001>

<llo_original>
// kernel: tpu_custom_call.1
$region0: #{tpu_custom_call.1}
  #allocation0 [shape = 'u32[]', space=smem, size = 0x4, offset = 0x4, fixed_abs, tag = 'smem constant byte address 0x4 - core index']
  #allocation1 [shape = 'u32[72,128]{1,0:T(1,128)}', space=vmem, size = 0x9000, scoped, tag = 'internal scratch']
  %s0 = inlined_call_operand.hbm [shape: f32[3,3,16,16], index: 0, kind: input, shape index: {}]
  %s1 = inlined_call_operand.hbm [shape: f32[3,3,16,16], index: 1, kind: input, shape index: {}]
  %s2 = inlined_call_operand.hbm [shape: f32[3,1,16,16], index: 2, kind: input, shape index: {}]
  %s3 = inlined_call_operand.hbm [shape: f32[3,1,16,16], index: 3, kind: input, shape index: {}]
  %s4 = inlined_call_operand.hbm [shape: f32[3,1,16,16], index: 4, kind: input, shape index: {}]
  %s5 = inlined_call_operand.hbm [shape: f32[3,16,16], index: 5, kind: input, shape index: {}]
  %s6 = inlined_call_operand.hbm [shape: f32[3,3,16,16], index: 6, kind: input, shape index: {}]
  %s7 = inlined_call_operand.hbm [shape: f32[3,3,16,16], index: 7, kind: input, shape index: {}]
  %s8 = inlined_call_operand.hbm [shape: f32[3,1,16,16], index: 8, kind: input, shape index: {}]
  %s9 = inlined_call_operand.hbm [shape: f32[3,1,16,16], index: 9, kind: input, shape index: {}]
  %s10 = inlined_call_operand.hbm [shape: f32[3,1,16,16], index: 10, kind: input, shape index: {}]
  %s11 = inlined_call_operand.hbm [shape: f32[3,16,16], index: 11, kind: input, shape index: {}]
  %s12 = inlined_call_operand.hbm [shape: f32[3,1,128], index: 12, kind: output, shape index: {0}]
  %s13 = inlined_call_operand.hbm [shape: f32[3,1,16,16], index: 13, kind: output, shape index: {1}]
  %14 = xla_tuple %s12, %s13
  %s15 = sld [smem:[#allocation0]]
  $region145: #{tpu_custom_call.1} parent=0
    _
  %s17 = ssub.s32 1, %s15
  %s18 = scalar_select 0, %s17, %s15
  $region1: #{tpu_custom_call.1} parent=0
    #allocation2 [shape = 'u8[16384]{0}', space=vmem, size = 0x4000, scoped, tag = 'input window, operand 0']
    #allocation3 [shape = 's32[2]{0}', space=sflag, size = 0x8, scoped, tag = 'scoped memory for tpu_custom_call.1']
    #allocation4 [shape = 's32[2]{0}', space=sflag, size = 0x8, scoped, tag = 'scoped memory for tpu_custom_call.1']
    #allocation5 [shape = 'u8[16384]{0}', space=vmem, size = 0x4000, scoped, tag = 'input window, operand 1']
    #allocation6 [shape = 's32[2]{0}', space=sflag, size = 0x8, scoped, tag = 'scoped memory for tpu_custom_call.1']
    #allocation7 [shape = 'u8[16384]{0}', space=vmem, size = 0x4000, scoped, tag = 'input window, operand 2']
    #allocation8 [shape = 'u8[16384]{0}', space=vmem, size = 0x4000, scoped, tag = 'input window, operand 3']
    #allocation9 [shape = 's32[2]{0}', space=sflag, size = 0x8, scoped, tag = 'scoped memory for tpu_custom_call.1']
    #allocation10 [shape = 'u8[16384]{0}', space=vmem, size = 0x4000, scoped, tag = 'input window, operand 4']
    #allocation11 [shape = 'u8[16384]{0}', space=vmem, size = 0x4000, scoped, tag = 'input window, operand 5']
    #allocation12 [shape = 's32[2]{0}', space=sflag, size = 0x8, scoped, tag = 'scoped memory for tpu_custom_call.1']
    #allocation13 [shape = 'u8[16384]{0}', space=vmem, size = 0x4000, scoped, tag = 'input window, operand 6']
    #allocation14 [shape = 'u8[16384]{0}', space=vmem, size = 0x4000, scoped, tag = 'input window, operand 7']
    #allocation15 [shape = 's32[2]{0}', space=sflag, size = 0x8, scoped, tag = 'scoped memory for tpu_custom_call.1']
    #allocation16 [shape = 'u8[16384]{0}', space=vmem, size = 0x4000, scoped, tag = 'input window, operand 8']
    #allocation17 [shape = 'u8[16384]{0}', space=vmem, size = 0x4000, scoped, tag = 'input window, operand 9']
    #allocation18 [shape = 's32[2]{0}', space=sflag, size = 0x8, scoped, tag = 'scoped memory for tpu_custom_call.1']
    #allocation19 [shape = 'u8[16384]{0}', space=vmem, size = 0x4000, scoped, tag = 'input window, operand 10']
    #allocation20 [shape = 'u8[16384]{0}', space=vmem, size = 0x4000, scoped, tag = 'input window, operand 11']
    #allocation21 [shape = 's32[2]{0}', space=sflag, size = 0x8, scoped, tag = 'scoped memory for tpu_custom_call.1']
    #allocation22 [shape = 'u8[1024]{0}', space=vmem, size = 0x400, scoped, tag = 'output window, operand 0']
    #allocation23 [shape = 'u8[16384]{0}', space=vmem, size = 0x4000, scoped, tag = 'output window, operand 1']
    #allocation24 [shape = 's32[2]{0}', space=sflag, size = 0x8, scoped, tag = 'scoped memory for tpu_custom_call.1']
    %19 = vsyncpa [#allocation3], 0
    %s20 = scalar_lea.sflag [#allocation3], 1
    %21 = vsyncpa %s20, 0
    %22 = vsyncpa [#allocation6], 0
    %s23 = scalar_lea.sflag [#allocation6], 1
    %24 = vsyncpa %s23, 0
    %25 = vsyncpa [#allocation9], 0
    %s26 = scalar_lea.sflag [#allocation9], 1
    %27 = vsyncpa %s26, 0
    %28 = vsyncpa [#allocation12], 0
    %s29 = scalar_lea.sflag [#allocation12], 1
    %30 = vsyncpa %s29, 0
    %31 = vsyncpa [#allocation15], 0
    %s32 = scalar_lea.sflag [#allocation15], 1
    %33 = vsyncpa %s32, 0
    %34 = vsyncpa [#allocation18], 0
    %s35 = scalar_lea.sflag [#allocation18], 1
    %36 = vsyncpa %s35, 0
    %37 = vsyncpa [#allocation21], 0
    %s38 = scalar_lea.sflag [#allocation21], 1
    %39 = vsyncpa %s38, 0
    %40 = vsyncpa [#allocation4], 0
    %s41 = scalar_lea.sflag [#allocation4], 1
    %42 = vsyncpa %s41, 0
    %43 = vsyncpa [#allocation24], 0
    %s44 = scalar_lea.sflag [#allocation24], 1
    %45 = vsyncpa %s44, 0
    loop: start=0, step=1, limit=11
    $region2: #{tpu_custom_call.1} parent=1 // loop_pre_header
      _
    $region3: #{tpu_custom_call.1} parent=1 // loop_header
      %s47 = sphi 0, %s51
      %p48 = scmp.ge.s32.totalorder %s47, 11
      %s54 = sphi 0, %s66
      %s55 = sphi 0, %s62
      %s56 = sphi 0, %s54
      %s57 = sphi 0, %s55
      %s58 = sphi 0, %s56
      %s59 = sphi 0, %s57
      %s71 = sphi 0, %s73
      %s74 = sphi 0, %s71
      %s75 = sphi 0, %s74
      %s91 = sphi 0, %s75
      %s99 = sphi 0, %s101
      %s102 = sphi 0, %s99
      %s103 = sphi 0, %s102
      %s119 = sphi 0, %s103
      %s125 = sphi 0, %s127
      %s128 = sphi 0, %s125
      %s129 = sphi 0, %s128
      %s145 = sphi 0, %s129
      %s151 = sphi 0, %s153
      %s154 = sphi 0, %s151
      %s155 = sphi 0, %s154
      %s171 = sphi 0, %s155
      %s177 = sphi 0, %s179
      %s180 = sphi 0, %s177
      %s181 = sphi 0, %s180
      %s197 = sphi 0, %s181
      %s203 = sphi 0, %s205
      %s206 = sphi 0, %s203
      %s207 = sphi 0, %s206
      %s223 = sphi 0, %s207
      %s231 = sphi 0, %s233
      %s234 = sphi 0, %s231
      %s235 = sphi 0, %s234
      %s251 = sphi 0, %s235
      %s259 = sphi 0, %s261
      %s262 = sphi 0, %s259
      %s263 = sphi 0, %s262
      %s279 = sphi 0, %s263
      %s285 = sphi 0, %s287
      %s288 = sphi 0, %s285
      %s289 = sphi 0, %s288
      %s305 = sphi 0, %s289
      %s311 = sphi 0, %s313
      %s314 = sphi 0, %s311
      %s315 = sphi 0, %s314
      %s331 = sphi 0, %s315
      %s337 = sphi 0, %s339
      %s340 = sphi 0, %s337
      %s341 = sphi 0, %s340
      %s357 = sphi 0, %s341
      %s363 = sphi 0, %s365
      %s366 = sphi 0, %s363
      %s367 = sphi 0, %s366
      %s383 = sphi 0, %s367
      %s389 = sphi 0, %s391
      %s392 = sphi 0, %s389
      %s393 = sphi 0, %s392
      %s409 = sphi 0, %s393
      %s415 = sphi 0, %s417
      %s418 = sphi 0, %s415
      %s419 = sphi 0, %s418
      %s435 = sphi 0, %s419
    $region4: #{tpu_custom_call.1} parent=1 // loop_header_branch
      %50 = sbr.rel (%p48) target = $region8
    $region5: #{tpu_custom_call.1} parent=1 // loop_body
      %s52 = ssub.s32 %s47, 1
      %s53 = ssub.s32 %s47, 2
      %s60 = sadd.s32 1, %s55
      %p61 = scmp.ge.s32.totalorder %s60, 3
      %s62 = scalar_select %p61, 0, %s60
      %s63 = sadd.s32 1, %s54
      %s64 = scalar_select %p61, %s63, %s54
      %p65 = scmp.ge.s32.totalorder %s64, 3
      %s66 = scalar_select %p65, 0, %s64
      %s67 = ssub.s32 %s54, %s66
      %s68 = ssub.s32 %s55, %s62
      %s69 = sor.u32 %s67, %s68
      %p70 = scmp.eq.s32.totalorder %s69, 0
      %s72 = sadd.s32 %s71, 1
      %s73 = scalar_select %p70, %s71, %s72
      %p76 = pneg %p70
      %p77 = scmp.eq.s32.totalorder %s47, 8
      %p78 = por %p76, %p77
      %p79 = scmp.ne.s32.totalorder %s71, %s74
      %p80 = scmp.eq.s32.totalorder %s47, 0
      %p81 = por %p79, %p80
      %p82 = scmp.ne.s32.totalorder %s71, %s74
      %p83 = scmp.eq.s32.totalorder %s52, 8
      %p84 = por %p82, %p83
      %p85 = scmp.ne.s32.totalorder %s74, %s75
      %p86 = scmp.eq.s32.totalorder %s52, 0
      %p87 = por %p85, %p86
      %p88 = scmp.ne.s32.totalorder %s74, %s75
      %p89 = scmp.eq.s32.totalorder %s53, 8
      %p90 = por %p88, %p89
      %p92 = scmp.ne.s32.totalorder %s75, %s91
      %p93 = scmp.eq.s32.totalorder %s53, 0
      %p94 = por %p92, %p93
      %s95 = ssub.s32 %s54, %s66
      %s96 = ssub.s32 %s55, %s62
      %s97 = sor.u32 %s95, %s96
      %p98 = scmp.eq.s32.totalorder %s97, 0
      %s100 = sadd.s32 %s99, 1
      %s101 = scalar_select %p98, %s99, %s100
      %p104 = pneg %p98
      %p105 = scmp.eq.s32.totalorder %s47, 8
      %p106 = por %p104, %p105
      %p107 = scmp.ne.s32.totalorder %s99, %s102
      %p108 = scmp.eq.s32.totalorder %s47, 0
      %p109 = por %p107, %p108
      %p110 = scmp.ne.s32.totalorder %s99, %s102
      %p111 = scmp.eq.s32.totalorder %s52, 8
      %p112 = por %p110, %p111
      %p113 = scmp.ne.s32.totalorder %s102, %s103
      %p114 = scmp.eq.s32.totalorder %s52, 0
      %p115 = por %p113, %p114
      %p116 = scmp.ne.s32.totalorder %s102, %s103
      %p117 = scmp.eq.s32.totalorder %s53, 8
      %p118 = por %p116, %p117
      %p120 = scmp.ne.s32.totalorder %s103, %s119
      %p121 = scmp.eq.s32.totalorder %s53, 0
      %p122 = por %p120, %p121
      %s123 = ssub.s32 %s54, %s66
      %p124 = scmp.eq.s32.totalorder %s123, 0
      %s126 = sadd.s32 %s125, 1
      %s127 = scalar_select %p124, %s125, %s126
      %p130 = pneg %p124
      %p131 = scmp.eq.s32.totalorder %s47, 8
      %p132 = por %p130, %p131
      %p133 = scmp.ne.s32.totalorder %s125, %s128
      %p134 = scmp.eq.s32.totalorder %s47, 0
      %p135 = por %p133, %p134
      %p136 = scmp.ne.s32.totalorder %s125, %s128
      %p137 = scmp.eq.s32.totalorder %s52, 8
      %p138 = por %p136, %p137
      %p139 = scmp.ne.s32.totalorder %s128, %s129
      %p140 = scmp.eq.s32.totalorder %s52, 0
      %p141 = por %p139, %p140
      %p142 = scmp.ne.s32.totalorder %s128, %s129
      %p143 = scmp.eq.s32.totalorder %s53, 8
      %p144 = por %p142, %p143
      %p146 = scmp.ne.s32.totalorder %s129, %s145
      %p147 = scmp.eq.s32.totalorder %s53, 0
      %p148 = por %p146, %p147
      %s149 = ssub.s32 %s54, %s66
      %p150 = scmp.eq.s32.totalorder %s149, 0
      %s152 = sadd.s32 %s151, 1
      %s153 = scalar_select %p150, %s151, %s152
      %p156 = pneg %p150
      %p157 = scmp.eq.s32.totalorder %s47, 8
      %p158 = por %p156, %p157
      %p159 = scmp.ne.s32.totalorder %s151, %s154
      %p160 = scmp.eq.s32.totalorder %s47, 0
      %p161 = por %p159, %p160
      %p162 = scmp.ne.s32.totalorder %s151, %s154
      %p163 = scmp.eq.s32.totalorder %s52, 8
      %p164 = por %p162, %p163
      %p165 = scmp.ne.s32.totalorder %s154, %s155
      %p166 = scmp.eq.s32.totalorder %s52, 0
      %p167 = por %p165, %p166
      %p168 = scmp.ne.s32.totalorder %s154, %s155
      %p169 = scmp.eq.s32.totalorder %s53, 8
      %p170 = por %p168, %p169
      %p172 = scmp.ne.s32.totalorder %s155, %s171
      %p173 = scmp.eq.s32.totalorder %s53, 0
      %p174 = por %p172, %p173
      %s175 = ssub.s32 %s54, %s66
      %p176 = scmp.eq.s32.totalorder %s175, 0
      %s178 = sadd.s32 %s177, 1
      %s179 = scalar_select %p176, %s177, %s178
      %p182 = pneg %p176
      %p183 = scmp.eq.s32.totalorder %s47, 8
      %p184 = por %p182, %p183
      %p185 = scmp.ne.s32.totalorder %s177, %s180
      %p186 = scmp.eq.s32.totalorder %s47, 0
      %p187 = por %p185, %p186
      %p188 = scmp.ne.s32.totalorder %s177, %s180
      %p189 = scmp.eq.s32.totalorder %s52, 8
      %p190 = por %p188, %p189
      %p191 = scmp.ne.s32.totalorder %s180, %s181
      %p192 = scmp.eq.s32.totalorder %s52, 0
      %p193 = por %p191, %p192
      %p194 = scmp.ne.s32.totalorder %s180, %s181
      %p195 = scmp.eq.s32.totalorder %s53, 8
      %p196 = por %p194, %p195
      %p198 = scmp.ne.s32.totalorder %s181, %s197
      %p199 = scmp.eq.s32.totalorder %s53, 0
      %p200 = por %p198, %p199
      %s201 = ssub.s32 %s54, %s66
      %p202 = scmp.eq.s32.totalorder %s201, 0
      %s204 = sadd.s32 %s203, 1
      %s205 = scalar_select %p202, %s203, %s204
      %p208 = pneg %p202
      %p209 = scmp.eq.s32.totalorder %s47, 8
      %p210 = por %p208, %p209
      %p211 = scmp.ne.s32.totalorder %s203, %s206
      %p212 = scmp.eq.s32.totalorder %s47, 0
      %p213 = por %p211, %p212
      %p214 = scmp.ne.s32.totalorder %s203, %s206
      %p215 = scmp.eq.s32.totalorder %s52, 8
      %p216 = por %p214, %p215
      %p217 = scmp.ne.s32.totalorder %s206, %s207
      %p218 = scmp.eq.s32.totalorder %s52, 0
      %p219 = por %p217, %p218
      %p220 = scmp.ne.s32.totalorder %s206, %s207
      %p221 = scmp.eq.s32.totalorder %s53, 8
      %p222 = por %p220, %p221
      %p224 = scmp.ne.s32.totalorder %s207, %s223
      %p225 = scmp.eq.s32.totalorder %s53, 0
      %p226 = por %p224, %p225
      %s227 = ssub.s32 %s54, %s66
      %s228 = ssub.s32 %s55, %s62
      %s229 = sor.u32 %s227, %s228
      %p230 = scmp.eq.s32.totalorder %s229, 0
      %s232 = sadd.s32 %s231, 1
      %s233 = scalar_select %p230, %s231, %s232
      %p236 = pneg %p230
      %p237 = scmp.eq.s32.totalorder %s47, 8
      %p238 = por %p236, %p237
      %p239 = scmp.ne.s32.totalorder %s231, %s234
      %p240 = scmp.eq.s32.totalorder %s47, 0
      %p241 = por %p239, %p240
      %p242 = scmp.ne.s32.totalorder %s231, %s234
      %p243 = scmp.eq.s32.totalorder %s52, 8
      %p244 = por %p242, %p243
      %p245 = scmp.ne.s32.totalorder %s234, %s235
      %p246 = scmp.eq.s32.totalorder %s52, 0
      %p247 = por %p245, %p246
      %p248 = scmp.ne.s32.totalorder %s234, %s235
      %p249 = scmp.eq.s32.totalorder %s53, 8
      %p250 = por %p248, %p249
      %p252 = scmp.ne.s32.totalorder %s235, %s251
      %p253 = scmp.eq.s32.totalorder %s53, 0
      %p254 = por %p252, %p253
      %s255 = ssub.s32 %s54, %s66
      %s256 = ssub.s32 %s55, %s62
      %s257 = sor.u32 %s255, %s256
      %p258 = scmp.eq.s32.totalorder %s257, 0
      %s260 = sadd.s32 %s259, 1
      %s261 = scalar_select %p258, %s259, %s260
      %p264 = pneg %p258
      %p265 = scmp.eq.s32.totalorder %s47, 8
      %p266 = por %p264, %p265
      %p267 = scmp.ne.s32.totalorder %s259, %s262
      %p268 = scmp.eq.s32.totalorder %s47, 0
      %p269 = por %p267, %p268
      %p270 = scmp.ne.s32.totalorder %s259, %s262
      %p271 = scmp.eq.s32.totalorder %s52, 8
      %p272 = por %p270, %p271
      %p273 = scmp.ne.s32.totalorder %s262, %s263
      %p274 = scmp.eq.s32.totalorder %s52, 0
      %p275 = por %p273, %p274
      %p276 = scmp.ne.s32.totalorder %s262, %s263
      %p277 = scmp.eq.s32.totalorder %s53, 8
      %p278 = por %p276, %p277
      %p280 = scmp.ne.s32.totalorder %s263, %s279
      %p281 = scmp.eq.s32.totalorder %s53, 0
      %p282 = por %p280, %p281
      %s283 = ssub.s32 %s54, %s66
      %p284 = scmp.eq.s32.totalorder %s283, 0
      %s286 = sadd.s32 %s285, 1
      %s287 = scalar_select %p284, %s285, %s286
      %p290 = pneg %p284
      %p291 = scmp.eq.s32.totalorder %s47, 8
      %p292 = por %p290, %p291
      %p293 = scmp.ne.s32.totalorder %s285, %s288
      %p294 = scmp.eq.s32.totalorder %s47, 0
      %p295 = por %p293, %p294
      %p296 = scmp.ne.s32.totalorder %s285, %s288
      %p297 = scmp.eq.s32.totalorder %s52, 8
      %p298 = por %p296, %p297
      %p299 = scmp.ne.s32.totalorder %s288, %s289
      %p300 = scmp.eq.s32.totalorder %s52, 0
      %p301 = por %p299, %p300
      %p302 = scmp.ne.s32.totalorder %s288, %s289
      %p303 = scmp.eq.s32.totalorder %s53, 8
      %p304 = por %p302, %p303
      %p306 = scmp.ne.s32.totalorder %s289, %s305
      %p307 = scmp.eq.s32.totalorder %s53, 0
      %p308 = por %p306, %p307
      %s309 = ssub.s32 %s54, %s66
      %p310 = scmp.eq.s32.totalorder %s309, 0
      %s312 = sadd.s32 %s311, 1
      %s313 = scalar_select %p310, %s311, %s312
      %p316 = pneg %p310
      %p317 = scmp.eq.s32.totalorder %s47, 8
      %p318 = por %p316, %p317
      %p319 = scmp.ne.s32.totalorder %s311, %s314
      %p320 = scmp.eq.s32.totalorder %s47, 0
      %p321 = por %p319, %p320
      %p322 = scmp.ne.s32.totalorder %s311, %s314
      %p323 = scmp.eq.s32.totalorder %s52, 8
      %p324 = por %p322, %p323
      %p325 = scmp.ne.s32.totalorder %s314, %s315
      %p326 = scmp.eq.s32.totalorder %s52, 0
      %p327 = por %p325, %p326
      %p328 = scmp.ne.s32.totalorder %s314, %s315
      %p329 = scmp.eq.s32.totalorder %s53, 8
      %p330 = por %p328, %p329
      %p332 = scmp.ne.s32.totalorder %s315, %s331
      %p333 = scmp.eq.s32.totalorder %s53, 0
      %p334 = por %p332, %p333
      %s335 = ssub.s32 %s54, %s66
      %p336 = scmp.eq.s32.totalorder %s335, 0
      %s338 = sadd.s32 %s337, 1
      %s339 = scalar_select %p336, %s337, %s338
      %p342 = pneg %p336
      %p343 = scmp.eq.s32.totalorder %s47, 8
      %p344 = por %p342, %p343
      %p345 = scmp.ne.s32.totalorder %s337, %s340
      %p346 = scmp.eq.s32.totalorder %s47, 0
      %p347 = por %p345, %p346
      %p348 = scmp.ne.s32.totalorder %s337, %s340
      %p349 = scmp.eq.s32.totalorder %s52, 8
      %p350 = por %p348, %p349
      %p351 = scmp.ne.s32.totalorder %s340, %s341
      %p352 = scmp.eq.s32.totalorder %s52, 0
      %p353 = por %p351, %p352
      %p354 = scmp.ne.s32.totalorder %s340, %s341
      %p355 = scmp.eq.s32.totalorder %s53, 8
      %p356 = por %p354, %p355
      %p358 = scmp.ne.s32.totalorder %s341, %s357
      %p359 = scmp.eq.s32.totalorder %s53, 0
      %p360 = por %p358, %p359
      %s361 = ssub.s32 %s54, %s66
      %p362 = scmp.eq.s32.totalorder %s361, 0
      %s364 = sadd.s32 %s363, 1
      %s365 = scalar_select %p362, %s363, %s364
      %p368 = pneg %p362
      %p369 = scmp.eq.s32.totalorder %s47, 8
      %p370 = por %p368, %p369
      %p371 = scmp.ne.s32.totalorder %s363, %s366
      %p372 = scmp.eq.s32.totalorder %s47, 0
      %p373 = por %p371, %p372
      %p374 = scmp.ne.s32.totalorder %s363, %s366
      %p375 = scmp.eq.s32.totalorder %s52, 8
      %p376 = por %p374, %p375
      %p377 = scmp.ne.s32.totalorder %s366, %s367
      %p378 = scmp.eq.s32.totalorder %s52, 0
      %p379 = por %p377, %p378
      %p380 = scmp.ne.s32.totalorder %s366, %s367
      %p381 = scmp.eq.s32.totalorder %s53, 8
      %p382 = por %p380, %p381
      %p384 = scmp.ne.s32.totalorder %s367, %s383
      %p385 = scmp.eq.s32.totalorder %s53, 0
      %p386 = por %p384, %p385
      %s387 = ssub.s32 %s54, %s66
      %p388 = scmp.eq.s32.totalorder %s387, 0
      %s390 = sadd.s32 %s389, 1
      %s391 = scalar_select %p388, %s389, %s390
      %p394 = pneg %p388
      %p395 = scmp.eq.s32.totalorder %s47, 8
      %p396 = por %p394, %p395
      %p397 = scmp.ne.s32.totalorder %s389, %s392
      %p398 = scmp.eq.s32.totalorder %s47, 0
      %p399 = por %p397, %p398
      %p400 = scmp.ne.s32.totalorder %s389, %s392
      %p401 = scmp.eq.s32.totalorder %s52, 8
      %p402 = por %p400, %p401
      %p403 = scmp.ne.s32.totalorder %s392, %s393
      %p404 = scmp.eq.s32.totalorder %s52, 0
      %p405 = por %p403, %p404
      %p406 = scmp.ne.s32.totalorder %s392, %s393
      %p407 = scmp.eq.s32.totalorder %s53, 8
      %p408 = por %p406, %p407
      %p410 = scmp.ne.s32.totalorder %s393, %s409
      %p411 = scmp.eq.s32.totalorder %s53, 0
      %p412 = por %p410, %p411
      %s413 = ssub.s32 %s54, %s66
      %p414 = scmp.eq.s32.totalorder %s413, 0
      %s416 = sadd.s32 %s415, 1
      %s417 = scalar_select %p414, %s415, %s416
      %p420 = pneg %p414
      %p421 = scmp.eq.s32.totalorder %s47, 8
      %p422 = por %p420, %p421
      %p423 = scmp.ne.s32.totalorder %s415, %s418
      %p424 = scmp.eq.s32.totalorder %s47, 0
      %p425 = por %p423, %p424
      %p426 = scmp.ne.s32.totalorder %s415, %s418
      %p427 = scmp.eq.s32.totalorder %s52, 8
      %p428 = por %p426, %p427
      %p429 = scmp.ne.s32.totalorder %s418, %s419
      %p430 = scmp.eq.s32.totalorder %s52, 0
      %p431 = por %p429, %p430
      %p432 = scmp.ne.s32.totalorder %s418, %s419
      %p433 = scmp.eq.s32.totalorder %s53, 8
      %p434 = por %p432, %p433
      %p436 = scmp.ne.s32.totalorder %s419, %s435
      %p437 = scmp.eq.s32.totalorder %s53, 0
      %p438 = por %p436, %p437
      %p439 = scmp.le.s32.totalorder 1, %s47
      %p440 = scmp.lt.s32.totalorder %s47, 10
      %p441 = pnand %p439, %p440
      %p442 = pneg %p441
      // Predicated region
      $region9: #{tpu_custom_call.1} parent=5 // pred_check
        _
      $region10: #{tpu_custom_call.1} parent=5 // pred_check_branch
        %444 = sbr.rel (%p441) target = $region12
      $region11: #{tpu_custom_call.1} parent=5 // pred_region
        %s445 = ssub.s32 %s47, 1
      $region12: #{tpu_custom_call.1} parent=5 // pred_fallthru
        _
      %p446 = scmp.lt.s32.totalorder %s47, 9
      // Predicated region
      $region13: #{tpu_custom_call.1} parent=5 // pred_check
        %p447 = pneg %p446
      $region14: #{tpu_custom_call.1} parent=5 // pred_check_branch
        %449 = sbr.rel (%p447) target = $region16
      $region15: #{tpu_custom_call.1} parent=5 // pred_region
        // Predicated region
        $region17: #{tpu_custom_call.1} parent=15 // pred_check
          %p450 = pneg %p81
        $region18: #{tpu_custom_call.1} parent=15 // pred_check_branch
          %452 = sbr.rel (%p450) target = $region20
        $region19: #{tpu_custom_call.1} parent=15 // pred_region
          %s453 = sand.u32 %s71, 1
          %s454 = scalar_lea.sflag [#allocation3], %s453
          %s455 = sand.u32 %s71, 1
          %s456 = smul.addr %s455, 16
          %s457 = scalar_lea.vmem [#allocation2], %s456
          %459 = vsyncadd %s454, 0
          %s460 = smul.addr %s55, 2
          %s461 = smul.addr %s54, 6
          %s462 = sadd.s32 %s460, %s461
          %s463 = smul.addr %s462, 8
          %s464 = scalar_lea.hbm %s0, %s463
          %s465 = sshll.u32 %s464, 4
          %s466 = int_to_ptr.hbm [resolvable:$true] %s465
          %s467 = sshll.u32 %s457, 4
          %s468 = int_to_ptr.vmem [resolvable:$true] %s467
          %473 = dma.hbm_to_vmem [thread:$0]  %s466, 256, %s468, %s454, 128, 128, 8
        $region20: #{tpu_custom_call.1} parent=15 // pred_fallthru
          _
        // Predicated region
        $region21: #{tpu_custom_call.1} parent=15 // pred_check
          %p474 = pneg %p109
        $region22: #{tpu_custom_call.1} parent=15 // pred_check_branch
          %476 = sbr.rel (%p474) target = $region24
        $region23: #{tpu_custom_call.1} parent=15 // pred_region
          %s477 = sand.u32 %s47, 1
          %s478 = scalar_lea.sflag [#allocation6], %s477
          %s479 = sand.u32 %s99, 1
          %s480 = smul.addr %s479, 16
          %s481 = scalar_lea.vmem [#allocation5], %s480
          %483 = vsyncadd %s478, 0
          %s484 = smul.addr %s55, 2
          %s485 = smul.addr %s54, 6
          %s486 = sadd.s32 %s484, %s485
          %s487 = smul.addr %s486, 8
          %s488 = scalar_lea.hbm %s1, %s487
          %s489 = sshll.u32 %s488, 4
          %s490 = int_to_ptr.hbm [resolvable:$true] %s489
          %s491 = sshll.u32 %s481, 4
          %s492 = int_to_ptr.vmem [resolvable:$true] %s491
          %497 = dma.hbm_to_vmem [thread:$0]  %s490, 256, %s492, %s478, 128, 128, 8
        $region24: #{tpu_custom_call.1} parent=15 // pred_fallthru
          _
        // Predicated region
        $region25: #{tpu_custom_call.1} parent=15 // pred_check
          %p498 = pneg %p135
        $region26: #{tpu_custom_call.1} parent=15 // pred_check_branch
          %500 = sbr.rel (%p498) target = $region28
        $region27: #{tpu_custom_call.1} parent=15 // pred_region
          %s501 = sand.u32 %s47, 1
          %s502 = scalar_lea.sflag [#allocation6], %s501
          %s503 = sand.u32 %s125, 1
          %s504 = smul.addr %s503, 16
          %s505 = scalar_lea.vmem [#allocation7], %s504
          %507 = vsyncadd %s502, 0
          %s508 = smul.addr %s54, 2
          %s509 = smul.addr %s508, 8
          %s510 = scalar_lea.hbm %s2, %s509
          %s511 = sshll.u32 %s510, 4
          %s512 = int_to_ptr.hbm [resolvable:$true] %s511
          %s513 = sshll.u32 %s505, 4
          %s514 = int_to_ptr.vmem [resolvable:$true] %s513
          %519 = dma.hbm_to_vmem [thread:$0]  %s512, 256, %s514, %s502, 128, 128, 8
        $region28: #{tpu_custom_call.1} parent=15 // pred_fallthru
          _
        // Predicated region
        $region29: #{tpu_custom_call.1} parent=15 // pred_check
          %p520 = pneg %p161
        $region30: #{tpu_custom_call.1} parent=15 // pred_check_branch
          %522 = sbr.rel (%p520) target = $region32
        $region31: #{tpu_custom_call.1} parent=15 // pred_region
          %s523 = sand.u32 %s47, 1
          %s524 = scalar_lea.sflag [#allocation9], %s523
          %s525 = sand.u32 %s151, 1
          %s526 = smul.addr %s525, 16
          %s527 = scalar_lea.vmem [#allocation8], %s526
          %529 = vsyncadd %s524, 0
          %s530 = smul.addr %s54, 2
          %s531 = smul.addr %s530, 8
          %s532 = scalar_lea.hbm %s3, %s531
          %s533 = sshll.u32 %s532, 4
          %s534 = int_to_ptr.hbm [resolvable:$true] %s533
          %s535 = sshll.u32 %s527, 4
          %s536 = int_to_ptr.vmem [resolvable:$true] %s535
          %541 = dma.hbm_to_vmem [thread:$0]  %s534, 256, %s536, %s524, 128, 128, 8
        $region32: #{tpu_custom_call.1} parent=15 // pred_fallthru
          _
        // Predicated region
        $region33: #{tpu_custom_call.1} parent=15 // pred_check
          %p542 = pneg %p187
        $region34: #{tpu_custom_call.1} parent=15 // pred_check_branch
          %544 = sbr.rel (%p542) target = $region36
        $region35: #{tpu_custom_call.1} parent=15 // pred_region
          %s545 = sand.u32 %s47, 1
          %s546 = scalar_lea.sflag [#allocation9], %s545
          %s547 = sand.u32 %s177, 1
          %s548 = smul.addr %s547, 16
          %s549 = scalar_lea.vmem [#allocation10], %s548
          %551 = vsyncadd %s546, 0
          %s552 = smul.addr %s54, 2
          %s553 = smul.addr %s552, 8
          %s554 = scalar_lea.hbm %s4, %s553
          %s555 = sshll.u32 %s554, 4
          %s556 = int_to_ptr.hbm [resolvable:$true] %s555
          %s557 = sshll.u32 %s549, 4
          %s558 = int_to_ptr.vmem [resolvable:$true] %s557
          %563 = dma.hbm_to_vmem [thread:$0]  %s556, 256, %s558, %s546, 128, 128, 8
        $region36: #{tpu_custom_call.1} parent=15 // pred_fallthru
          _
        // Predicated region
        $region37: #{tpu_custom_call.1} parent=15 // pred_check
          %p564 = pneg %p213
        $region38: #{tpu_custom_call.1} parent=15 // pred_check_branch
          %566 = sbr.rel (%p564) target = $region40
        $region39: #{tpu_custom_call.1} parent=15 // pred_region
          %s567 = sand.u32 %s47, 1
          %s568 = scalar_lea.sflag [#allocation12], %s567
          %s569 = sand.u32 %s203, 1
          %s570 = smul.addr %s569, 16
          %s571 = scalar_lea.vmem [#allocation11], %s570
          %573 = vsyncadd %s568, 0
          %s574 = smul.addr %s54, 2
          %s575 = smul.addr %s574, 8
          %s576 = scalar_lea.hbm %s5, %s575
          %s577 = sshll.u32 %s576, 4
          %s578 = int_to_ptr.hbm [resolvable:$true] %s577
          %s579 = sshll.u32 %s571, 4
          %s580 = int_to_ptr.vmem [resolvable:$true] %s579
          %585 = dma.hbm_to_vmem [thread:$0]  %s578, 256, %s580, %s568, 128, 128, 8
        $region40: #{tpu_custom_call.1} parent=15 // pred_fallthru
          _
        // Predicated region
        $region41: #{tpu_custom_call.1} parent=15 // pred_check
          %p586 = pneg %p241
        $region42: #{tpu_custom_call.1} parent=15 // pred_check_branch
          %588 = sbr.rel (%p586) target = $region44
        $region43: #{tpu_custom_call.1} parent=15 // pred_region
          %s589 = sand.u32 %s47, 1
          %s590 = scalar_lea.sflag [#allocation12], %s589
          %s591 = sand.u32 %s231, 1
          %s592 = smul.addr %s591, 16
          %s593 = scalar_lea.vmem [#allocation13], %s592
          %595 = vsyncadd %s590, 0
          %s596 = smul.addr %s55, 2
          %s597 = smul.addr %s54, 6
          %s598 = sadd.s32 %s596, %s597
          %s599 = smul.addr %s598, 8
          %s600 = scalar_lea.hbm %s6, %s599
          %s601 = sshll.u32 %s600, 4
          %s602 = int_to_ptr.hbm [resolvable:$true] %s601
          %s603 = sshll.u32 %s593, 4
          %s604 = int_to_ptr.vmem [resolvable:$true] %s603
          %609 = dma.hbm_to_vmem [thread:$0]  %s602, 256, %s604, %s590, 128, 128, 8
        $region44: #{tpu_custom_call.1} parent=15 // pred_fallthru
          _
        // Predicated region
        $region45: #{tpu_custom_call.1} parent=15 // pred_check
          %p610 = pneg %p269
        $region46: #{tpu_custom_call.1} parent=15 // pred_check_branch
          %612 = sbr.rel (%p610) target = $region48
        $region47: #{tpu_custom_call.1} parent=15 // pred_region
          %s613 = sand.u32 %s47, 1
          %s614 = scalar_lea.sflag [#allocation15], %s613
          %s615 = sand.u32 %s259, 1
          %s616 = smul.addr %s615, 16
          %s617 = scalar_lea.vmem [#allocation14], %s616
          %619 = vsyncadd %s614, 0
          %s620 = smul.addr %s55, 2
          %s621 = smul.addr %s54, 6
          %s622 = sadd.s32 %s620, %s621
          %s623 = smul.addr %s622, 8
          %s624 = scalar_lea.hbm %s7, %s623
          %s625 = sshll.u32 %s624, 4
          %s626 = int_to_ptr.hbm [resolvable:$true] %s625
          %s627 = sshll.u32 %s617, 4
          %s628 = int_to_ptr.vmem [resolvable:$true] %s627
          %633 = dma.hbm_to_vmem [thread:$0]  %s626, 256, %s628, %s614, 128, 128, 8
        $region48: #{tpu_custom_call.1} parent=15 // pred_fallthru
          _
        // Predicated region
        $region49: #{tpu_custom_call.1} parent=15 // pred_check
          %p634 = pneg %p295
        $region50: #{tpu_custom_call.1} parent=15 // pred_check_branch
          %636 = sbr.rel (%p634) target = $region52
        $region51: #{tpu_custom_call.1} parent=15 // pred_region
          %s637 = sand.u32 %s47, 1
          %s638 = scalar_lea.sflag [#allocation15], %s637
          %s639 = sand.u32 %s285, 1
          %s640 = smul.addr %s639, 16
          %s641 = scalar_lea.vmem [#allocation16], %s640
          %643 = vsyncadd %s638, 0
          %s644 = smul.addr %s54, 2
          %s645 = smul.addr %s644, 8
          %s646 = scalar_lea.hbm %s8, %s645
          %s647 = sshll.u32 %s646, 4
          %s648 = int_to_ptr.hbm [resolvable:$true] %s647
          %s649 = sshll.u32 %s641, 4
          %s650 = int_to_ptr.vmem [resolvable:$true] %s649
          %655 = dma.hbm_to_vmem [thread:$0]  %s648, 256, %s650, %s638, 128, 128, 8
        $region52: #{tpu_custom_call.1} parent=15 // pred_fallthru
          _
        // Predicated region
        $region53: #{tpu_custom_call.1} parent=15 // pred_check
          %p656 = pneg %p321
        $region54: #{tpu_custom_call.1} parent=15 // pred_check_branch
          %658 = sbr.rel (%p656) target = $region56
        $region55: #{tpu_custom_call.1} parent=15 // pred_region
          %s659 = sand.u32 %s47, 1
          %s660 = scalar_lea.sflag [#allocation18], %s659
          %s661 = sand.u32 %s311, 1
          %s662 = smul.addr %s661, 16
          %s663 = scalar_lea.vmem [#allocation17], %s662
          %665 = vsyncadd %s660, 0
          %s666 = smul.addr %s54, 2
          %s667 = smul.addr %s666, 8
          %s668 = scalar_lea.hbm %s9, %s667
          %s669 = sshll.u32 %s668, 4
          %s670 = int_to_ptr.hbm [resolvable:$true] %s669
          %s671 = sshll.u32 %s663, 4
          %s672 = int_to_ptr.vmem [resolvable:$true] %s671
          %677 = dma.hbm_to_vmem [thread:$0]  %s670, 256, %s672, %s660, 128, 128, 8
        $region56: #{tpu_custom_call.1} parent=15 // pred_fallthru
          _
        // Predicated region
        $region57: #{tpu_custom_call.1} parent=15 // pred_check
          %p678 = pneg %p347
        $region58: #{tpu_custom_call.1} parent=15 // pred_check_branch
          %680 = sbr.rel (%p678) target = $region60
        $region59: #{tpu_custom_call.1} parent=15 // pred_region
          %s681 = sand.u32 %s47, 1
          %s682 = scalar_lea.sflag [#allocation18], %s681
          %s683 = sand.u32 %s337, 1
          %s684 = smul.addr %s683, 16
          %s685 = scalar_lea.vmem [#allocation19], %s684
          %687 = vsyncadd %s682, 0
          %s688 = smul.addr %s54, 2
          %s689 = smul.addr %s688, 8
          %s690 = scalar_lea.hbm %s10, %s689
          %s691 = sshll.u32 %s690, 4
          %s692 = int_to_ptr.hbm [resolvable:$true] %s691
          %s693 = sshll.u32 %s685, 4
          %s694 = int_to_ptr.vmem [resolvable:$true] %s693
          %699 = dma.hbm_to_vmem [thread:$0]  %s692, 256, %s694, %s682, 128, 128, 8
        $region60: #{tpu_custom_call.1} parent=15 // pred_fallthru
          _
        // Predicated region
        $region61: #{tpu_custom_call.1} parent=15 // pred_check
          %p700 = pneg %p373
        $region62: #{tpu_custom_call.1} parent=15 // pred_check_branch
          %702 = sbr.rel (%p700) target = $region64
        $region63: #{tpu_custom_call.1} parent=15 // pred_region
          %s703 = sand.u32 %s363, 1
          %s704 = scalar_lea.sflag [#allocation21], %s703
          %s705 = sand.u32 %s363, 1
          %s706 = smul.addr %s705, 16
          %s707 = scalar_lea.vmem [#allocation20], %s706
          %709 = vsyncadd %s704, 0
          %s710 = smul.addr %s54, 2
          %s711 = smul.addr %s710, 8
          %s712 = scalar_lea.hbm %s11, %s711
          %s713 = sshll.u32 %s712, 4
          %s714 = int_to_ptr.hbm [resolvable:$true] %s713
          %s715 = sshll.u32 %s707, 4
          %s716 = int_to_ptr.vmem [resolvable:$true] %s715
          %721 = dma.hbm_to_vmem [thread:$0]  %s714, 256, %s716, %s704, 128, 128, 8
        $region64: #{tpu_custom_call.1} parent=15 // pred_fallthru
          _
      $region16: #{tpu_custom_call.1} parent=5 // pred_fallthru
        _
      %p722 = scmp.le.s32.totalorder 1, %s47
      %p723 = scmp.lt.s32.totalorder %s47, 10
      %p724 = pnand %p722, %p723
      %p725 = pneg %p724
      // Predicated region
      $region65: #{tpu_custom_call.1} parent=5 // pred_check
        _
      $region66: #{tpu_custom_call.1} parent=5 // pred_check_branch
        %727 = sbr.rel (%p724) target = $region68
      $region67: #{tpu_custom_call.1} parent=5 // pred_region
        %s728 = ssub.s32 %s47, 1
        %s729 = sand.u32 %s74, 1
        %s730 = scalar_lea.sflag [#allocation3], %s729
        %s731 = sand.u32 %s74, 1
        %s732 = smul.addr %s731, 16
        %s733 = scalar_lea.vmem [#allocation2], %s732
        // Predicated region
        $region69: #{tpu_custom_call.1} parent=67 // pred_check
          %p734 = pneg %p87
        $region70: #{tpu_custom_call.1} parent=67 // pred_check_branch
          %736 = sbr.rel (%p734) target = $region72
        $region71: #{tpu_custom_call.1} parent=67 // pred_region
          %738 = dma.done %s730, 256
        $region72: #{tpu_custom_call.1} parent=67 // pred_fallthru
          _
        %s739 = sand.u32 %s52, 1
        %s740 = scalar_lea.sflag [#allocation6], %s739
        %s741 = sand.u32 %s102, 1
        %s742 = smul.addr %s741, 16
        %s743 = scalar_lea.vmem [#allocation5], %s742
        // Predicated region
        $region73: #{tpu_custom_call.1} parent=67 // pred_check
          %p744 = pneg %p115
        $region74: #{tpu_custom_call.1} parent=67 // pred_check_branch
          %746 = sbr.rel (%p744) target = $region76
        $region75: #{tpu_custom_call.1} parent=67 // pred_region
          %748 = dma.done %s740, 256
        $region76: #{tpu_custom_call.1} parent=67 // pred_fallthru
          _
        %s749 = sand.u32 %s52, 1
        %s750 = scalar_lea.sflag [#allocation6], %s749
        %s751 = sand.u32 %s128, 1
        %s752 = smul.addr %s751, 16
        %s753 = scalar_lea.vmem [#allocation7], %s752
        // Predicated region
        $region77: #{tpu_custom_call.1} parent=67 // pred_check
          %p754 = pneg %p141
        $region78: #{tpu_custom_call.1} parent=67 // pred_check_branch
          %756 = sbr.rel (%p754) target = $region80
        $region79: #{tpu_custom_call.1} parent=67 // pred_region
          %758 = dma.done %s750, 256
        $region80: #{tpu_custom_call.1} parent=67 // pred_fallthru
          _
        %s759 = sand.u32 %s52, 1
        %s760 = scalar_lea.sflag [#allocation9], %s759
        %s761 = sand.u32 %s154, 1
        %s762 = smul.addr %s761, 16
        %s763 = scalar_lea.vmem [#allocation8], %s762
        // Predicated region
        $region81: #{tpu_custom_call.1} parent=67 // pred_check
          %p764 = pneg %p167
        $region82: #{tpu_custom_call.1} parent=67 // pred_check_branch
          %766 = sbr.rel (%p764) target = $region84
        $region83: #{tpu_custom_call.1} parent=67 // pred_region
          %768 = dma.done %s760, 256
        $region84: #{tpu_custom_call.1} parent=67 // pred_fallthru
          _
        %s769 = sand.u32 %s52, 1
        %s770 = scalar_lea.sflag [#allocation9], %s769
        %s771 = sand.u32 %s180, 1
        %s772 = smul.addr %s771, 16
        %s773 = scalar_lea.vmem [#allocation10], %s772
        // Predicated region
        $region85: #{tpu_custom_call.1} parent=67 // pred_check
          %p774 = pneg %p193
        $region86: #{tpu_custom_call.1} parent=67 // pred_check_branch
          %776 = sbr.rel (%p774) target = $region88
        $region87: #{tpu_custom_call.1} parent=67 // pred_region
          %778 = dma.done %s770, 256
        $region88: #{tpu_custom_call.1} parent=67 // pred_fallthru
          _
        %s779 = sand.u32 %s52, 1
        %s780 = scalar_lea.sflag [#allocation12], %s779
        %s781 = sand.u32 %s206, 1
        %s782 = smul.addr %s781, 16
        %s783 = scalar_lea.vmem [#allocation11], %s782
        // Predicated region
        $region89: #{tpu_custom_call.1} parent=67 // pred_check
          %p784 = pneg %p219
        $region90: #{tpu_custom_call.1} parent=67 // pred_check_branch
          %786 = sbr.rel (%p784) target = $region92
        $region91: #{tpu_custom_call.1} parent=67 // pred_region
          %788 = dma.done %s780, 256
        $region92: #{tpu_custom_call.1} parent=67 // pred_fallthru
          _
        %s789 = sand.u32 %s52, 1
        %s790 = scalar_lea.sflag [#allocation12], %s789
        %s791 = sand.u32 %s234, 1
        %s792 = smul.addr %s791, 16
        %s793 = scalar_lea.vmem [#allocation13], %s792
        // Predicated region
        $region93: #{tpu_custom_call.1} parent=67 // pred_check
          %p794 = pneg %p247
        $region94: #{tpu_custom_call.1} parent=67 // pred_check_branch
          %796 = sbr.rel (%p794) target = $region96
        $region95: #{tpu_custom_call.1} parent=67 // pred_region
          %798 = dma.done %s790, 256
        $region96: #{tpu_custom_call.1} parent=67 // pred_fallthru
          _
        %s799 = sand.u32 %s52, 1
        %s800 = scalar_lea.sflag [#allocation15], %s799
        %s801 = sand.u32 %s262, 1
        %s802 = smul.addr %s801, 16
        %s803 = scalar_lea.vmem [#allocation14], %s802
        // Predicated region
        $region97: #{tpu_custom_call.1} parent=67 // pred_check
          %p804 = pneg %p275
        $region98: #{tpu_custom_call.1} parent=67 // pred_check_branch
          %806 = sbr.rel (%p804) target = $region100
        $region99: #{tpu_custom_call.1} parent=67 // pred_region
          %808 = dma.done %s800, 256
        $region100: #{tpu_custom_call.1} parent=67 // pred_fallthru
          _
        %s809 = sand.u32 %s52, 1
        %s810 = scalar_lea.sflag [#allocation15], %s809
        %s811 = sand.u32 %s288, 1
        %s812 = smul.addr %s811, 16
        %s813 = scalar_lea.vmem [#allocation16], %s812
        // Predicated region
        $region101: #{tpu_custom_call.1} parent=67 // pred_check
          %p814 = pneg %p301
        $region102: #{tpu_custom_call.1} parent=67 // pred_check_branch
          %816 = sbr.rel (%p814) target = $region104
        $region103: #{tpu_custom_call.1} parent=67 // pred_region
          %818 = dma.done %s810, 256
        $region104: #{tpu_custom_call.1} parent=67 // pred_fallthru
          _
        %s819 = sand.u32 %s52, 1
        %s820 = scalar_lea.sflag [#allocation18], %s819
        %s821 = sand.u32 %s314, 1
        %s822 = smul.addr %s821, 16
        %s823 = scalar_lea.vmem [#allocation17], %s822
        // Predicated region
        $region105: #{tpu_custom_call.1} parent=67 // pred_check
          %p824 = pneg %p327
        $region106: #{tpu_custom_call.1} parent=67 // pred_check_branch
          %826 = sbr.rel (%p824) target = $region108
        $region107: #{tpu_custom_call.1} parent=67 // pred_region
          %828 = dma.done %s820, 256
        $region108: #{tpu_custom_call.1} parent=67 // pred_fallthru
          _
        %s829 = sand.u32 %s52, 1
        %s830 = scalar_lea.sflag [#allocation18], %s829
        %s831 = sand.u32 %s340, 1
        %s832 = smul.addr %s831, 16
        %s833 = scalar_lea.vmem [#allocation19], %s832
        // Predicated region
        $region109: #{tpu_custom_call.1} parent=67 // pred_check
          %p834 = pneg %p353
        $region110: #{tpu_custom_call.1} parent=67 // pred_check_branch
          %836 = sbr.rel (%p834) target = $region112
        $region111: #{tpu_custom_call.1} parent=67 // pred_region
          %838 = dma.done %s830, 256
        $region112: #{tpu_custom_call.1} parent=67 // pred_fallthru
          _
        %s839 = sand.u32 %s366, 1
        %s840 = scalar_lea.sflag [#allocation21], %s839
        %s841 = sand.u32 %s366, 1
        %s842 = smul.addr %s841, 16
        %s843 = scalar_lea.vmem [#allocation20], %s842
        // Predicated region
        $region113: #{tpu_custom_call.1} parent=67 // pred_check
          %p844 = pneg %p379
        $region114: #{tpu_custom_call.1} parent=67 // pred_check_branch
          %846 = sbr.rel (%p844) target = $region116
        $region115: #{tpu_custom_call.1} parent=67 // pred_region
          %848 = dma.done %s840, 256
        $region116: #{tpu_custom_call.1} parent=67 // pred_fallthru
          _
        %s849 = sand.u32 %s74, 1
        %s850 = scalar_lea.sflag [#allocation3], %s849
        %s851 = sand.u32 %s74, 1
        %s852 = smul.addr %s851, 16
        %s853 = scalar_lea.vmem [#allocation2], %s852
        %p854 = pneg %p87
        %p855 = pneg %p84
        %s856 = sand.u32 %s52, 1
        %s857 = scalar_lea.sflag [#allocation6], %s856
        %s858 = sand.u32 %s102, 1
        %s859 = smul.addr %s858, 16
        %s860 = scalar_lea.vmem [#allocation5], %s859
        %p861 = pneg %p115
        %p862 = pneg %p112
        %s863 = sand.u32 %s52, 1
        %s864 = scalar_lea.sflag [#allocation6], %s863
        %s865 = sand.u32 %s128, 1
        %s866 = smul.addr %s865, 16
        %s867 = scalar_lea.vmem [#allocation7], %s866
        %p868 = pneg %p141
        %p869 = pneg %p138
        %s870 = sand.u32 %s52, 1
        %s871 = scalar_lea.sflag [#allocation9], %s870
        %s872 = sand.u32 %s154, 1
        %s873 = smul.addr %s872, 16
        %s874 = scalar_lea.vmem [#allocation8], %s873
        %p875 = pneg %p167
        %p876 = pneg %p164
        %s877 = sand.u32 %s52, 1
        %s878 = scalar_lea.sflag [#allocation9], %s877
        %s879 = sand.u32 %s180, 1
        %s880 = smul.addr %s879, 16
        %s881 = scalar_lea.vmem [#allocation10], %s880
        %p882 = pneg %p193
        %p883 = pneg %p190
        %s884 = sand.u32 %s52, 1
        %s885 = scalar_lea.sflag [#allocation12], %s884
        %s886 = sand.u32 %s206, 1
        %s887 = smul.addr %s886, 16
        %s888 = scalar_lea.vmem [#allocation11], %s887
        %p889 = pneg %p219
        %p890 = pneg %p216
        %s891 = sand.u32 %s52, 1
        %s892 = scalar_lea.sflag [#allocation12], %s891
        %s893 = sand.u32 %s234, 1
        %s894 = smul.addr %s893, 16
        %s895 = scalar_lea.vmem [#allocation13], %s894
        %p896 = pneg %p247
        %p897 = pneg %p244
        %s898 = sand.u32 %s52, 1
        %s899 = scalar_lea.sflag [#allocation15], %s898
        %s900 = sand.u32 %s262, 1
        %s901 = smul.addr %s900, 16
        %s902 = scalar_lea.vmem [#allocation14], %s901
        %p903 = pneg %p275
        %p904 = pneg %p272
        %s905 = sand.u32 %s52, 1
        %s906 = scalar_lea.sflag [#allocation15], %s905
        %s907 = sand.u32 %s288, 1
        %s908 = smul.addr %s907, 16
        %s909 = scalar_lea.vmem [#allocation16], %s908
        %p910 = pneg %p301
        %p911 = pneg %p298
        %s912 = sand.u32 %s52, 1
        %s913 = scalar_lea.sflag [#allocation18], %s912
        %s914 = sand.u32 %s314, 1
        %s915 = smul.addr %s914, 16
        %s916 = scalar_lea.vmem [#allocation17], %s915
        %p917 = pneg %p327
        %p918 = pneg %p324
        %s919 = sand.u32 %s52, 1
        %s920 = scalar_lea.sflag [#allocation18], %s919
        %s921 = sand.u32 %s340, 1
        %s922 = smul.addr %s921, 16
        %s923 = scalar_lea.vmem [#allocation19], %s922
        %p924 = pneg %p353
        %p925 = pneg %p350
        %s926 = sand.u32 %s366, 1
        %s927 = scalar_lea.sflag [#allocation21], %s926
        %s928 = sand.u32 %s366, 1
        %s929 = smul.addr %s928, 16
        %s930 = scalar_lea.vmem [#allocation20], %s929
        %p931 = pneg %p379
        %p932 = pneg %p376
        %p933 = pneg %p405
        %p934 = pneg %p402
        %s935 = sand.u32 %s392, 1
        %s936 = scalar_lea.sflag [#allocation4], %s935
        %s937 = sand.u32 %s392, 1
        %s938 = scalar_lea.vmem [#allocation22], %s937
        %p939 = pneg %p431
        %p940 = pneg %p428
        %s941 = sand.u32 %s418, 1
        %s942 = scalar_lea.sflag [#allocation24], %s941
        %s943 = sand.u32 %s418, 1
        %s944 = smul.addr %s943, 16
        %s945 = scalar_lea.vmem [#allocation23], %s944
        %v946 = vlaneseq
        %v947 = vand.u32 %v946, 127
        %v948 = vlaneseq
        %v949 = vshrl.u32 %v948, 7
        %v950 = vadd.s32 %v949, 8
        %vm951 = vcmp.eq.s32.totalorder %v947, 0
        %vm952 = vcmp.eq.s32.totalorder %v947, 15
        %vm953 = vcmp.eq.s32.totalorder %v949, 0
        %vm954 = vcmp.eq.s32.totalorder %v950, 0
        %vm955 = vcmp.eq.s32.totalorder %v949, 15
        %vm956 = vcmp.eq.s32.totalorder %v950, 15
        %v957 = vld [vmem:[%s733] sm:$0xff]
        %v958 = vld [vmem:[%s733 + $0x8] sm:$0xff]
        %v959 = vld [vmem:[%s743] sm:$0xff]
        %v960 = vld [vmem:[%s743 + $0x8] sm:$0xff]
        %v961 = vld [vmem:[%s753] sm:$0xff]
        %v962 = vld [vmem:[%s753 + $0x8] sm:$0xff]
        %v963 = vsub.f32 %v957, %v959
        %v964 = vsub.f32 %v958, %v960
        %v965 = vand.u32 2147483647, %v963
        %v966 = vand.u32 2147483647, %v964
        %969 = vrot.lane.b32.xlu0 %v957, 1
        %v970 = vpop.permute.xlu0 %969
        %971 = vrot.lane.b32.xlu0 %v958, 1
        %v972 = vpop.permute.xlu0 %971
        %vm975 = vcmask 7168
        %v976 = vsel %vm975, %v957, %v970
        %v977 = vsel %vm975, %v958, %v972
        %978 = vrot.lane.b32.xlu0 %v957, 127
        %v979 = vpop.permute.xlu0 %978
        %980 = vrot.lane.b32.xlu0 %v958, 127
        %v981 = vpop.permute.xlu0 %980
        %vm984 = vcmask 121856
        %v985 = vsel %vm984, %v979, %v957
        %v986 = vsel %vm984, %v981, %v958
        %v987 = vsel %vm951, %v985, %v976
        %v988 = vsel %vm951, %v986, %v977
        %v989 = vsel %vm952, %v976, %v985
        %v990 = vsel %vm952, %v977, %v986
        %v991 = vadd.f32 %v987, %v957
        %v992 = vadd.f32 %v988, %v958
        %v993 = vadd.f32 %v991, %v989
        %v994 = vadd.f32 %v992, %v990
        %vm997 = vcmask 1040384
        %v998 = vrot.slane %v993, 7
        %v999 = vrot.slane %v994, 7
        %v1000 = vsel %vm997, %v998, %v999
        %v1003 = vsel %vm997, %v993, %v998
        %vm1004 = vcmask 1046528
        %v1005 = vrot.slane %v993, 1
        %v1006 = vrot.slane %v994, 1
        %v1007 = vsel %vm1004, %v1005, %v1006
        %v1010 = vsel %vm1004, %v1006, %v994
        %v1011 = vsel %vm953, %v1007, %v1003
        %v1012 = vsel %vm954, %v1010, %v1000
        %v1013 = vsel %vm955, %v1003, %v1007
        %v1014 = vsel %vm956, %v1000, %v1010
        %v1015 = vadd.f32 %v1011, %v993
        %v1016 = vadd.f32 %v1012, %v994
        %v1017 = vadd.f32 %v1015, %v1013
        %v1018 = vadd.f32 %v1016, %v1014
        %v1019 = vmul.f32 %v1017, 0.11111111
        %v1020 = vmul.f32 %v1018, 0.11111111
        %1023 = vrot.lane.b32.xlu0 %v959, 1
        %v1024 = vpop.permute.xlu0 %1023
        %1025 = vrot.lane.b32.xlu0 %v960, 1
        %v1026 = vpop.permute.xlu0 %1025
        %v1029 = vsel %vm975, %v959, %v1024
        %v1030 = vsel %vm975, %v960, %v1026
        %1031 = vrot.lane.b32.xlu0 %v959, 127
        %v1032 = vpop.permute.xlu0 %1031
        %1033 = vrot.lane.b32.xlu0 %v960, 127
        %v1034 = vpop.permute.xlu0 %1033
        %v1037 = vsel %vm984, %v1032, %v959
        %v1038 = vsel %vm984, %v1034, %v960
        %v1039 = vsel %vm951, %v1037, %v1029
        %v1040 = vsel %vm951, %v1038, %v1030
        %v1041 = vsel %vm952, %v1029, %v1037
        %v1042 = vsel %vm952, %v1030, %v1038
        %v1043 = vadd.f32 %v1039, %v959
        %v1044 = vadd.f32 %v1040, %v960
        %v1045 = vadd.f32 %v1043, %v1041
        %v1046 = vadd.f32 %v1044, %v1042
        %v1049 = vrot.slane %v1045, 7
        %v1050 = vrot.slane %v1046, 7
        %v1051 = vsel %vm997, %v1049, %v1050
        %v1054 = vsel %vm997, %v1045, %v1049
        %v1055 = vrot.slane %v1045, 1
        %v1056 = vrot.slane %v1046, 1
        %v1057 = vsel %vm1004, %v1055, %v1056
        %v1060 = vsel %vm1004, %v1056, %v1046
        %v1061 = vsel %vm953, %v1057, %v1054
        %v1062 = vsel %vm954, %v1060, %v1051
        %v1063 = vsel %vm955, %v1054, %v1057
        %v1064 = vsel %vm956, %v1051, %v1060
        %v1065 = vadd.f32 %v1061, %v1045
        %v1066 = vadd.f32 %v1062, %v1046
        %v1067 = vadd.f32 %v1065, %v1063
        %v1068 = vadd.f32 %v1066, %v1064
        %v1069 = vmul.f32 %v1067, 0.11111111
        %v1070 = vmul.f32 %v1068, 0.11111111
        %v1071 = vmul.f32 %v957, %v957
        %v1072 = vmul.f32 %v958, %v958
        %1075 = vrot.lane.b32.xlu0 %v1071, 1
        %v1076 = vpop.permute.xlu0 %1075
        %1077 = vrot.lane.b32.xlu0 %v1072, 1
        %v1078 = vpop.permute.xlu0 %1077
        %v1081 = vsel %vm975, %v1071, %v1076
        %v1082 = vsel %vm975, %v1072, %v1078
        %1083 = vrot.lane.b32.xlu0 %v1071, 127
        %v1084 = vpop.permute.xlu0 %1083
        %1085 = vrot.lane.b32.xlu0 %v1072, 127
        %v1086 = vpop.permute.xlu0 %1085
        %v1089 = vsel %vm984, %v1084, %v1071
        %v1090 = vsel %vm984, %v1086, %v1072
        %v1091 = vsel %vm951, %v1089, %v1081
        %v1092 = vsel %vm951, %v1090, %v1082
        %v1093 = vsel %vm952, %v1081, %v1089
        %v1094 = vsel %vm952, %v1082, %v1090
        %v1095 = vadd.f32 %v1091, %v1071
        %v1096 = vadd.f32 %v1092, %v1072
        %v1097 = vadd.f32 %v1095, %v1093
        %v1098 = vadd.f32 %v1096, %v1094
        %v1101 = vrot.slane %v1097, 7
        %v1102 = vrot.slane %v1098, 7
        %v1103 = vsel %vm997, %v1101, %v1102
        %v1106 = vsel %vm997, %v1097, %v1101
        %v1107 = vrot.slane %v1097, 1
        %v1108 = vrot.slane %v1098, 1
        %v1109 = vsel %vm1004, %v1107, %v1108
        %v1112 = vsel %vm1004, %v1108, %v1098
        %v1113 = vsel %vm953, %v1109, %v1106
        %v1114 = vsel %vm954, %v1112, %v1103
        %v1115 = vsel %vm955, %v1106, %v1109
        %v1116 = vsel %vm956, %v1103, %v1112
        %v1117 = vadd.f32 %v1113, %v1097
        %v1118 = vadd.f32 %v1114, %v1098
        %v1119 = vadd.f32 %v1117, %v1115
        %v1120 = vadd.f32 %v1118, %v1116
        %v1121 = vmul.f32 %v1119, 0.11111111
        %v1122 = vmul.f32 %v1120, 0.11111111
        %v1123 = vmul.f32 %v1019, %v1019
        %v1124 = vmul.f32 %v1020, %v1020
        %v1125 = vsub.f32 %v1121, %v1123
        %v1126 = vsub.f32 %v1122, %v1124
        %v1127 = vmul.f32 %v959, %v959
        %v1128 = vmul.f32 %v960, %v960
        %1131 = vrot.lane.b32.xlu0 %v1127, 1
        %v1132 = vpop.permute.xlu0 %1131
        %1133 = vrot.lane.b32.xlu0 %v1128, 1
        %v1134 = vpop.permute.xlu0 %1133
        %v1137 = vsel %vm975, %v1127, %v1132
        %v1138 = vsel %vm975, %v1128, %v1134
        %1139 = vrot.lane.b32.xlu0 %v1127, 127
        %v1140 = vpop.permute.xlu0 %1139
        %1141 = vrot.lane.b32.xlu0 %v1128, 127
        %v1142 = vpop.permute.xlu0 %1141
        %v1145 = vsel %vm984, %v1140, %v1127
        %v1146 = vsel %vm984, %v1142, %v1128
        %v1147 = vsel %vm951, %v1145, %v1137
        %v1148 = vsel %vm951, %v1146, %v1138
        %v1149 = vsel %vm952, %v1137, %v1145
        %v1150 = vsel %vm952, %v1138, %v1146
        %v1151 = vadd.f32 %v1147, %v1127
        %v1152 = vadd.f32 %v1148, %v1128
        %v1153 = vadd.f32 %v1151, %v1149
        %v1154 = vadd.f32 %v1152, %v1150
        %v1157 = vrot.slane %v1153, 7
        %v1158 = vrot.slane %v1154, 7
        %v1159 = vsel %vm997, %v1157, %v1158
        %v1162 = vsel %vm997, %v1153, %v1157
        %v1163 = vrot.slane %v1153, 1
        %v1164 = vrot.slane %v1154, 1
        %v1165 = vsel %vm1004, %v1163, %v1164
        %v1168 = vsel %vm1004, %v1164, %v1154
        %v1169 = vsel %vm953, %v1165, %v1162
        %v1170 = vsel %vm954, %v1168, %v1159
        %v1171 = vsel %vm955, %v1162, %v1165
        %v1172 = vsel %vm956, %v1159, %v1168
        %v1173 = vadd.f32 %v1169, %v1153
        %v1174 = vadd.f32 %v1170, %v1154
        %v1175 = vadd.f32 %v1173, %v1171
        %v1176 = vadd.f32 %v1174, %v1172
        %v1177 = vmul.f32 %v1175, 0.11111111
        %v1178 = vmul.f32 %v1176, 0.11111111
        %v1179 = vmul.f32 %v1069, %v1069
        %v1180 = vmul.f32 %v1070, %v1070
        %v1181 = vsub.f32 %v1177, %v1179
        %v1182 = vsub.f32 %v1178, %v1180
        %v1183 = vmul.f32 %v957, %v959
        %v1184 = vmul.f32 %v958, %v960
        %1187 = vrot.lane.b32.xlu0 %v1183, 1
        %v1188 = vpop.permute.xlu0 %1187
        %1189 = vrot.lane.b32.xlu0 %v1184, 1
        %v1190 = vpop.permute.xlu0 %1189
        %v1193 = vsel %vm975, %v1183, %v1188
        %v1194 = vsel %vm975, %v1184, %v1190
        %1195 = vrot.lane.b32.xlu0 %v1183, 127
        %v1196 = vpop.permute.xlu0 %1195
        %1197 = vrot.lane.b32.xlu0 %v1184, 127
        %v1198 = vpop.permute.xlu0 %1197
        %v1201 = vsel %vm984, %v1196, %v1183
        %v1202 = vsel %vm984, %v1198, %v1184
        %v1203 = vsel %vm951, %v1201, %v1193
        %v1204 = vsel %vm951, %v1202, %v1194
        %v1205 = vsel %vm952, %v1193, %v1201
        %v1206 = vsel %vm952, %v1194, %v1202
        %v1207 = vadd.f32 %v1203, %v1183
        %v1208 = vadd.f32 %v1204, %v1184
        %v1209 = vadd.f32 %v1207, %v1205
        %v1210 = vadd.f32 %v1208, %v1206
        %v1213 = vrot.slane %v1209, 7
        %v1214 = vrot.slane %v1210, 7
        %v1215 = vsel %vm997, %v1213, %v1214
        %v1218 = vsel %vm997, %v1209, %v1213
        %v1219 = vrot.slane %v1209, 1
        %v1220 = vrot.slane %v1210, 1
        %v1221 = vsel %vm1004, %v1219, %v1220
        %v1224 = vsel %vm1004, %v1220, %v1210
        %v1225 = vsel %vm953, %v1221, %v1218
        %v1226 = vsel %vm954, %v1224, %v1215
        %v1227 = vsel %vm955, %v1218, %v1221
        %v1228 = vsel %vm956, %v1215, %v1224
        %v1229 = vadd.f32 %v1225, %v1209
        %v1230 = vadd.f32 %v1226, %v1210
        %v1231 = vadd.f32 %v1229, %v1227
        %v1232 = vadd.f32 %v1230, %v1228
        %v1233 = vmul.f32 %v1231, 0.11111111
        %v1234 = vmul.f32 %v1232, 0.11111111
        %v1235 = vmul.f32 %v1019, %v1069
        %v1236 = vmul.f32 %v1020, %v1070
        %v1237 = vsub.f32 %v1233, %v1235
        %v1238 = vsub.f32 %v1234, %v1236
        %v1239 = vmul.f32 %v1019, 2.0
        %v1240 = vmul.f32 %v1020, 2.0
        %v1241 = vmul.f32 %v1239, %v1069
        %v1242 = vmul.f32 %v1240, %v1070
        %v1243 = vadd.f32 %v1241, 0.0001
        %v1244 = vadd.f32 %v1242, 0.0001
        %v1245 = vmul.f32 %v1237, 2.0
        %v1246 = vmul.f32 %v1238, 2.0
        %v1247 = vadd.f32 %v1245, 0.0009
        %v1248 = vadd.f32 %v1246, 0.0009
        %v1249 = vmul.f32 %v1243, %v1247
        %v1250 = vmul.f32 %v1244, %v1248
        %v1251 = vadd.f32 %v1123, %v1179
        %v1252 = vadd.f32 %v1124, %v1180
        %v1253 = vadd.f32 %v1251, 0.0001
        %v1254 = vadd.f32 %v1252, 0.0001
        %v1255 = vadd.f32 %v1125, %v1181
        %v1256 = vadd.f32 %v1126, %v1182
        %v1257 = vadd.f32 %v1255, 0.0009
        %v1258 = vadd.f32 %v1256, 0.0009
        %v1259 = vmul.f32 %v1253, %v1257
        %v1260 = vmul.f32 %v1254, %v1258
        %v1261 = vrcp.pop %v1259
        %v1262 = vmul.f32 %v1259, %v1261
        %v1263 = vsub.f32 1.0, %v1262
        %v1264 = vmul.f32 %v1261, %v1263
        %v1265 = vadd.f32 %v1261, %v1264
        %vm1266 = vweird.f32 %v1259
        %vm1267 = vweird.f32 %v1261
        %vm1268 = vmor %vm1266, %vm1267
        %v1269 = vsel %vm1268, %v1261, %v1265
        %v1270 = vand.u32 2147483647, %v1259
        %vm1271 = vcmp.eq.f32.partialorder %v1270, 8.507059e+37
        %v1272 = vand.u32 %v1259, 2147483648
        %v1273 = vor.u32 1.1754944e-38, %v1272
        %v1274 = vsel %vm1271, %v1273, %v1269
        %v1275 = vmul.f32 %v1249, %v1274
        %v1276 = vrcp.pop %v1260
        %v1277 = vmul.f32 %v1260, %v1276
        %v1278 = vsub.f32 1.0, %v1277
        %v1279 = vmul.f32 %v1276, %v1278
        %v1280 = vadd.f32 %v1276, %v1279
        %vm1281 = vweird.f32 %v1260
        %vm1282 = vweird.f32 %v1276
        %vm1283 = vmor %vm1281, %vm1282
        %v1284 = vsel %vm1283, %v1276, %v1280
        %v1285 = vand.u32 2147483647, %v1260
        %vm1286 = vcmp.eq.f32.partialorder %v1285, 8.507059e+37
        %v1287 = vand.u32 %v1260, 2147483648
        %v1288 = vor.u32 1.1754944e-38, %v1287
        %v1289 = vsel %vm1286, %v1288, %v1284
        %v1290 = vmul.f32 %v1250, %v1289
        %v1291 = vsub.f32 1.0, %v1275
        %v1292 = vsub.f32 1.0, %v1290
        %v1293 = vmul.f32 %v1291, 0.5
        %v1294 = vmul.f32 %v1292, 0.5
        %v1295 = vmax.f32 %v1293, 0.0
        %v1296 = vmax.f32 %v1294, 0.0
        %v1297 = vmin.f32 %v1295, 1.0
        %v1298 = vmin.f32 %v1296, 1.0
        %v1299 = vmul.f32 %v965, 0.15
        %v1300 = vmul.f32 %v966, 0.15
        %v1301 = vmul.f32 %v1297, 0.85
        %v1302 = vmul.f32 %v1298, 0.85
        %v1303 = vadd.f32 %v1299, %v1301
        %v1304 = vadd.f32 %v1300, %v1302
        %v1305 = vmul.f32 %v1303, %v961
        %v1306 = vmul.f32 %v1304, %v962
        %vm1307 = vcmask 130048
        %v1308 = vsel %vm1307, %v1305, 0.0
        %v1309 = vsel %vm1307, %v1306, 0.0
        %v1310 = vadd.f32 %v1308, %v1309
        %1311 = vadd.xlane.f32.xlu0 %v1310
        %v1312 = vpop.xlane.xlu0 %1311
        %v1313 = vrot.slane %v1312, 4
        %v1314 = vadd.f32 %v1312, %v1313
        %v1315 = vrot.slane %v1314, 2
        %v1316 = vadd.f32 %v1314, %v1315
        %v1317 = vrot.slane %v1316, 1
        %v1318 = vadd.f32 %v1316, %v1317
        %s1319 = vtos %v1318
        %v1320 = vstv %s1319
        %v1321 = vld [vmem:[%s793] sm:$0xff]
        %v1322 = vld [vmem:[%s793 + $0x8] sm:$0xff]
        %v1323 = vld [vmem:[%s803] sm:$0xff]
        %v1324 = vld [vmem:[%s803 + $0x8] sm:$0xff]
        %v1325 = vld [vmem:[%s813] sm:$0xff]
        %v1326 = vld [vmem:[%s813 + $0x8] sm:$0xff]
        %v1327 = vsub.f32 %v1321, %v1323
        %v1328 = vsub.f32 %v1322, %v1324
        %v1329 = vand.u32 2147483647, %v1327
        %v1330 = vand.u32 2147483647, %v1328
        %1333 = vrot.lane.b32.xlu0 %v1321, 1
        %v1334 = vpop.permute.xlu0 %1333
        %1335 = vrot.lane.b32.xlu0 %v1322, 1
        %v1336 = vpop.permute.xlu0 %1335
        %v1339 = vsel %vm975, %v1321, %v1334
        %v1340 = vsel %vm975, %v1322, %v1336
        %1341 = vrot.lane.b32.xlu0 %v1321, 127
        %v1342 = vpop.permute.xlu0 %1341
        %1343 = vrot.lane.b32.xlu0 %v1322, 127
        %v1344 = vpop.permute.xlu0 %1343
        %v1347 = vsel %vm984, %v1342, %v1321
        %v1348 = vsel %vm984, %v1344, %v1322
        %v1349 = vsel %vm951, %v1347, %v1339
        %v1350 = vsel %vm951, %v1348, %v1340
        %v1351 = vsel %vm952, %v1339, %v1347
        %v1352 = vsel %vm952, %v1340, %v1348
        %v1353 = vadd.f32 %v1349, %v1321
        %v1354 = vadd.f32 %v1350, %v1322
        %v1355 = vadd.f32 %v1353, %v1351
        %v1356 = vadd.f32 %v1354, %v1352
        %v1359 = vrot.slane %v1355, 7
        %v1360 = vrot.slane %v1356, 7
        %v1361 = vsel %vm997, %v1359, %v1360
        %v1364 = vsel %vm997, %v1355, %v1359
        %v1365 = vrot.slane %v1355, 1
        %v1366 = vrot.slane %v1356, 1
        %v1367 = vsel %vm1004, %v1365, %v1366
        %v1370 = vsel %vm1004, %v1366, %v1356
        %v1371 = vsel %vm953, %v1367, %v1364
        %v1372 = vsel %vm954, %v1370, %v1361
        %v1373 = vsel %vm955, %v1364, %v1367
        %v1374 = vsel %vm956, %v1361, %v1370
        %v1375 = vadd.f32 %v1371, %v1355
        %v1376 = vadd.f32 %v1372, %v1356
        %v1377 = vadd.f32 %v1375, %v1373
        %v1378 = vadd.f32 %v1376, %v1374
        %v1379 = vmul.f32 %v1377, 0.11111111
        %v1380 = vmul.f32 %v1378, 0.11111111
        %1383 = vrot.lane.b32.xlu0 %v1323, 1
        %v1384 = vpop.permute.xlu0 %1383
        %1385 = vrot.lane.b32.xlu0 %v1324, 1
        %v1386 = vpop.permute.xlu0 %1385
        %v1389 = vsel %vm975, %v1323, %v1384
        %v1390 = vsel %vm975, %v1324, %v1386
        %1391 = vrot.lane.b32.xlu0 %v1323, 127
        %v1392 = vpop.permute.xlu0 %1391
        %1393 = vrot.lane.b32.xlu0 %v1324, 127
        %v1394 = vpop.permute.xlu0 %1393
        %v1397 = vsel %vm984, %v1392, %v1323
        %v1398 = vsel %vm984, %v1394, %v1324
        %v1399 = vsel %vm951, %v1397, %v1389
        %v1400 = vsel %vm951, %v1398, %v1390
        %v1401 = vsel %vm952, %v1389, %v1397
        %v1402 = vsel %vm952, %v1390, %v1398
        %v1403 = vadd.f32 %v1399, %v1323
        %v1404 = vadd.f32 %v1400, %v1324
        %v1405 = vadd.f32 %v1403, %v1401
        %v1406 = vadd.f32 %v1404, %v1402
        %v1409 = vrot.slane %v1405, 7
        %v1410 = vrot.slane %v1406, 7
        %v1411 = vsel %vm997, %v1409, %v1410
        %v1414 = vsel %vm997, %v1405, %v1409
        %v1415 = vrot.slane %v1405, 1
        %v1416 = vrot.slane %v1406, 1
        %v1417 = vsel %vm1004, %v1415, %v1416
        %v1420 = vsel %vm1004, %v1416, %v1406
        %v1421 = vsel %vm953, %v1417, %v1414
        %v1422 = vsel %vm954, %v1420, %v1411
        %v1423 = vsel %vm955, %v1414, %v1417
        %v1424 = vsel %vm956, %v1411, %v1420
        %v1425 = vadd.f32 %v1421, %v1405
        %v1426 = vadd.f32 %v1422, %v1406
        %v1427 = vadd.f32 %v1425, %v1423
        %v1428 = vadd.f32 %v1426, %v1424
        %v1429 = vmul.f32 %v1427, 0.11111111
        %v1430 = vmul.f32 %v1428, 0.11111111
        %v1431 = vmul.f32 %v1321, %v1321
        %v1432 = vmul.f32 %v1322, %v1322
        %1435 = vrot.lane.b32.xlu0 %v1431, 1
        %v1436 = vpop.permute.xlu0 %1435
        %1437 = vrot.lane.b32.xlu0 %v1432, 1
        %v1438 = vpop.permute.xlu0 %1437
        %v1441 = vsel %vm975, %v1431, %v1436
        %v1442 = vsel %vm975, %v1432, %v1438
        %1443 = vrot.lane.b32.xlu0 %v1431, 127
        %v1444 = vpop.permute.xlu0 %1443
        %1445 = vrot.lane.b32.xlu0 %v1432, 127
        %v1446 = vpop.permute.xlu0 %1445
        %v1449 = vsel %vm984, %v1444, %v1431
        %v1450 = vsel %vm984, %v1446, %v1432
        %v1451 = vsel %vm951, %v1449, %v1441
        %v1452 = vsel %vm951, %v1450, %v1442
        %v1453 = vsel %vm952, %v1441, %v1449
        %v1454 = vsel %vm952, %v1442, %v1450
        %v1455 = vadd.f32 %v1451, %v1431
        %v1456 = vadd.f32 %v1452, %v1432
        %v1457 = vadd.f32 %v1455, %v1453
        %v1458 = vadd.f32 %v1456, %v1454
        %v1461 = vrot.slane %v1457, 7
        %v1462 = vrot.slane %v1458, 7
        %v1463 = vsel %vm997, %v1461, %v1462
        %v1466 = vsel %vm997, %v1457, %v1461
        %v1467 = vrot.slane %v1457, 1
        %v1468 = vrot.slane %v1458, 1
        %v1469 = vsel %vm1004, %v1467, %v1468
        %v1472 = vsel %vm1004, %v1468, %v1458
        %v1473 = vsel %vm953, %v1469, %v1466
        %v1474 = vsel %vm954, %v1472, %v1463
        %v1475 = vsel %vm955, %v1466, %v1469
        %v1476 = vsel %vm956, %v1463, %v1472
        %v1477 = vadd.f32 %v1473, %v1457
        %v1478 = vadd.f32 %v1474, %v1458
        %v1479 = vadd.f32 %v1477, %v1475
        %v1480 = vadd.f32 %v1478, %v1476
        %v1481 = vmul.f32 %v1479, 0.11111111
        %v1482 = vmul.f32 %v1480, 0.11111111
        %v1483 = vmul.f32 %v1379, %v1379
        %v1484 = vmul.f32 %v1380, %v1380
        %v1485 = vsub.f32 %v1481, %v1483
        %v1486 = vsub.f32 %v1482, %v1484
        %v1487 = vmul.f32 %v1323, %v1323
        %v1488 = vmul.f32 %v1324, %v1324
        %1491 = vrot.lane.b32.xlu0 %v1487, 1
        %v1492 = vpop.permute.xlu0 %1491
        %1493 = vrot.lane.b32.xlu0 %v1488, 1
        %v1494 = vpop.permute.xlu0 %1493
        %v1497 = vsel %vm975, %v1487, %v1492
        %v1498 = vsel %vm975, %v1488, %v1494
        %1499 = vrot.lane.b32.xlu0 %v1487, 127
        %v1500 = vpop.permute.xlu0 %1499
        %1501 = vrot.lane.b32.xlu0 %v1488, 127
        %v1502 = vpop.permute.xlu0 %1501
        %v1505 = vsel %vm984, %v1500, %v1487
        %v1506 = vsel %vm984, %v1502, %v1488
        %v1507 = vsel %vm951, %v1505, %v1497
        %v1508 = vsel %vm951, %v1506, %v1498
        %v1509 = vsel %vm952, %v1497, %v1505
        %v1510 = vsel %vm952, %v1498, %v1506
        %v1511 = vadd.f32 %v1507, %v1487
        %v1512 = vadd.f32 %v1508, %v1488
        %v1513 = vadd.f32 %v1511, %v1509
        %v1514 = vadd.f32 %v1512, %v1510
        %v1517 = vrot.slane %v1513, 7
        %v1518 = vrot.slane %v1514, 7
        %v1519 = vsel %vm997, %v1517, %v1518
        %v1522 = vsel %vm997, %v1513, %v1517
        %v1523 = vrot.slane %v1513, 1
        %v1524 = vrot.slane %v1514, 1
        %v1525 = vsel %vm1004, %v1523, %v1524
        %v1528 = vsel %vm1004, %v1524, %v1514
        %v1529 = vsel %vm953, %v1525, %v1522
        %v1530 = vsel %vm954, %v1528, %v1519
        %v1531 = vsel %vm955, %v1522, %v1525
        %v1532 = vsel %vm956, %v1519, %v1528
        %v1533 = vadd.f32 %v1529, %v1513
        %v1534 = vadd.f32 %v1530, %v1514
        %v1535 = vadd.f32 %v1533, %v1531
        %v1536 = vadd.f32 %v1534, %v1532
        %v1537 = vmul.f32 %v1535, 0.11111111
        %v1538 = vmul.f32 %v1536, 0.11111111
        %v1539 = vmul.f32 %v1429, %v1429
        %v1540 = vmul.f32 %v1430, %v1430
        %v1541 = vsub.f32 %v1537, %v1539
        %v1542 = vsub.f32 %v1538, %v1540
        %v1543 = vmul.f32 %v1321, %v1323
        %v1544 = vmul.f32 %v1322, %v1324
        %1547 = vrot.lane.b32.xlu0 %v1543, 1
        %v1548 = vpop.permute.xlu0 %1547
        %1549 = vrot.lane.b32.xlu0 %v1544, 1
        %v1550 = vpop.permute.xlu0 %1549
        %v1553 = vsel %vm975, %v1543, %v1548
        %v1554 = vsel %vm975, %v1544, %v1550
        %1555 = vrot.lane.b32.xlu0 %v1543, 127
        %v1556 = vpop.permute.xlu0 %1555
        %1557 = vrot.lane.b32.xlu0 %v1544, 127
        %v1558 = vpop.permute.xlu0 %1557
        %v1561 = vsel %vm984, %v1556, %v1543
        %v1562 = vsel %vm984, %v1558, %v1544
        %v1563 = vsel %vm951, %v1561, %v1553
        %v1564 = vsel %vm951, %v1562, %v1554
        %v1565 = vsel %vm952, %v1553, %v1561
        %v1566 = vsel %vm952, %v1554, %v1562
        %v1567 = vadd.f32 %v1563, %v1543
        %v1568 = vadd.f32 %v1564, %v1544
        %v1569 = vadd.f32 %v1567, %v1565
        %v1570 = vadd.f32 %v1568, %v1566
        %v1573 = vrot.slane %v1569, 7
        %v1574 = vrot.slane %v1570, 7
        %v1575 = vsel %vm997, %v1573, %v1574
        %v1578 = vsel %vm997, %v1569, %v1573
        %v1579 = vrot.slane %v1569, 1
        %v1580 = vrot.slane %v1570, 1
        %v1581 = vsel %vm1004, %v1579, %v1580
        %v1584 = vsel %vm1004, %v1580, %v1570
        %v1585 = vsel %vm953, %v1581, %v1578
        %v1586 = vsel %vm954, %v1584, %v1575
        %v1587 = vsel %vm955, %v1578, %v1581
        %v1588 = vsel %vm956, %v1575, %v1584
        %v1589 = vadd.f32 %v1585, %v1569
        %v1590 = vadd.f32 %v1586, %v1570
        %v1591 = vadd.f32 %v1589, %v1587
        %v1592 = vadd.f32 %v1590, %v1588
        %v1593 = vmul.f32 %v1591, 0.11111111
        %v1594 = vmul.f32 %v1592, 0.11111111
        %v1595 = vmul.f32 %v1379, %v1429
        %v1596 = vmul.f32 %v1380, %v1430
        %v1597 = vsub.f32 %v1593, %v1595
        %v1598 = vsub.f32 %v1594, %v1596
        %v1599 = vmul.f32 %v1379, 2.0
        %v1600 = vmul.f32 %v1380, 2.0
        %v1601 = vmul.f32 %v1599, %v1429
        %v1602 = vmul.f32 %v1600, %v1430
        %v1603 = vadd.f32 %v1601, 0.0001
        %v1604 = vadd.f32 %v1602, 0.0001
        %v1605 = vmul.f32 %v1597, 2.0
        %v1606 = vmul.f32 %v1598, 2.0
        %v1607 = vadd.f32 %v1605, 0.0009
        %v1608 = vadd.f32 %v1606, 0.0009
        %v1609 = vmul.f32 %v1603, %v1607
        %v1610 = vmul.f32 %v1604, %v1608
        %v1611 = vadd.f32 %v1483, %v1539
        %v1612 = vadd.f32 %v1484, %v1540
        %v1613 = vadd.f32 %v1611, 0.0001
        %v1614 = vadd.f32 %v1612, 0.0001
        %v1615 = vadd.f32 %v1485, %v1541
        %v1616 = vadd.f32 %v1486, %v1542
        %v1617 = vadd.f32 %v1615, 0.0009
        %v1618 = vadd.f32 %v1616, 0.0009
        %v1619 = vmul.f32 %v1613, %v1617
        %v1620 = vmul.f32 %v1614, %v1618
        %v1621 = vrcp.pop %v1619
        %v1622 = vmul.f32 %v1619, %v1621
        %v1623 = vsub.f32 1.0, %v1622
        %v1624 = vmul.f32 %v1621, %v1623
        %v1625 = vadd.f32 %v1621, %v1624
        %vm1626 = vweird.f32 %v1619
        %vm1627 = vweird.f32 %v1621
        %vm1628 = vmor %vm1626, %vm1627
        %v1629 = vsel %vm1628, %v1621, %v1625
        %v1630 = vand.u32 2147483647, %v1619
        %vm1631 = vcmp.eq.f32.partialorder %v1630, 8.507059e+37
        %v1632 = vand.u32 %v1619, 2147483648
        %v1633 = vor.u32 1.1754944e-38, %v1632
        %v1634 = vsel %vm1631, %v1633, %v1629
        %v1635 = vmul.f32 %v1609, %v1634
        %v1636 = vrcp.pop %v1620
        %v1637 = vmul.f32 %v1620, %v1636
        %v1638 = vsub.f32 1.0, %v1637
        %v1639 = vmul.f32 %v1636, %v1638
        %v1640 = vadd.f32 %v1636, %v1639
        %vm1641 = vweird.f32 %v1620
        %vm1642 = vweird.f32 %v1636
        %vm1643 = vmor %vm1641, %vm1642
        %v1644 = vsel %vm1643, %v1636, %v1640
        %v1645 = vand.u32 2147483647, %v1620
        %vm1646 = vcmp.eq.f32.partialorder %v1645, 8.507059e+37
        %v1647 = vand.u32 %v1620, 2147483648
        %v1648 = vor.u32 1.1754944e-38, %v1647
        %v1649 = vsel %vm1646, %v1648, %v1644
        %v1650 = vmul.f32 %v1610, %v1649
        %v1651 = vsub.f32 1.0, %v1635
        %v1652 = vsub.f32 1.0, %v1650
        %v1653 = vmul.f32 %v1651, 0.5
        %v1654 = vmul.f32 %v1652, 0.5
        %v1655 = vmax.f32 %v1653, 0.0
        %v1656 = vmax.f32 %v1654, 0.0
        %v1657 = vmin.f32 %v1655, 1.0
        %v1658 = vmin.f32 %v1656, 1.0
        %v1659 = vmul.f32 %v1329, 0.15
        %v1660 = vmul.f32 %v1330, 0.15
        %v1661 = vmul.f32 %v1657, 0.85
        %v1662 = vmul.f32 %v1658, 0.85
        %v1663 = vadd.f32 %v1659, %v1661
        %v1664 = vadd.f32 %v1660, %v1662
        %v1665 = vmul.f32 %v1663, %v1325
        %v1666 = vmul.f32 %v1664, %v1326
        %v1667 = vsel %vm1307, %v1665, 0.0
        %v1668 = vsel %vm1307, %v1666, 0.0
        %v1669 = vadd.f32 %v1667, %v1668
        %1670 = vadd.xlane.f32.xlu0 %v1669
        %v1671 = vpop.xlane.xlu0 %1670
        %v1672 = vrot.slane %v1671, 4
        %v1673 = vadd.f32 %v1671, %v1672
        %v1674 = vrot.slane %v1673, 2
        %v1675 = vadd.f32 %v1673, %v1674
        %v1676 = vrot.slane %v1675, 1
        %v1677 = vadd.f32 %v1675, %v1676
        %s1678 = vtos %v1677
        %v1679 = vstv %s1678
        %p1680 = scmp.eq.s32.totalorder %s57, 0
        // Predicated region
        $region117: #{tpu_custom_call.1} parent=67 // pred_check
          %p1681 = pneg %p1680
        $region118: #{tpu_custom_call.1} parent=67 // pred_check_branch
          %1683 = sbr.rel (%p1681) target = $region120
        $region119: #{tpu_custom_call.1} parent=67 // pred_region
          %v1684 = vld [vmem:[%s753] sm:$0xff]
          %v1685 = vld [vmem:[%s753 + $0x8] sm:$0xff]
          %v1686 = vld [vmem:[%s763] sm:$0xff]
          %v1687 = vld [vmem:[%s763 + $0x8] sm:$0xff]
          %v1688 = vld [vmem:[%s773] sm:$0xff]
          %v1689 = vld [vmem:[%s773 + $0x8] sm:$0xff]
          %v1690 = vsub.f32 %v1688, %v1686
          %v1691 = vsub.f32 %v1689, %v1687
          %v1692 = vand.u32 2147483647, %v1690
          %v1693 = vand.u32 2147483647, %v1691
          %v1694 = vadd.f32 %v1688, %v1686
          %v1695 = vadd.f32 %v1689, %v1687
          %v1696 = vand.u32 2147483647, %v1694
          %v1697 = vand.u32 2147483647, %v1695
          %v1698 = vrcp.pop %v1696
          %v1699 = vmul.f32 %v1696, %v1698
          %v1700 = vsub.f32 1.0, %v1699
          %v1701 = vmul.f32 %v1698, %v1700
          %v1702 = vadd.f32 %v1698, %v1701
          %vm1703 = vweird.f32 %v1696
          %vm1704 = vweird.f32 %v1698
          %vm1705 = vmor %vm1703, %vm1704
          %v1706 = vsel %vm1705, %v1698, %v1702
          %v1707 = vand.u32 2147483647, %v1696
          %vm1708 = vcmp.eq.f32.partialorder %v1707, 8.507059e+37
          %v1709 = vand.u32 %v1696, 2147483648
          %v1710 = vor.u32 1.1754944e-38, %v1709
          %v1711 = vsel %vm1708, %v1710, %v1706
          %v1712 = vmul.f32 %v1692, %v1711
          %v1713 = vrcp.pop %v1697
          %v1714 = vmul.f32 %v1697, %v1713
          %v1715 = vsub.f32 1.0, %v1714
          %v1716 = vmul.f32 %v1713, %v1715
          %v1717 = vadd.f32 %v1713, %v1716
          %vm1718 = vweird.f32 %v1697
          %vm1719 = vweird.f32 %v1713
          %vm1720 = vmor %vm1718, %vm1719
          %v1721 = vsel %vm1720, %v1713, %v1717
          %v1722 = vand.u32 2147483647, %v1697
          %vm1723 = vcmp.eq.f32.partialorder %v1722, 8.507059e+37
          %v1724 = vand.u32 %v1697, 2147483648
          %v1725 = vor.u32 1.1754944e-38, %v1724
          %v1726 = vsel %vm1723, %v1725, %v1721
          %v1727 = vmul.f32 %v1693, %v1726
          %v1728 = vmax.f32 %v1712, 0.0
          %v1729 = vmax.f32 %v1727, 0.0
          %v1730 = vmin.f32 %v1728, 1.0
          %v1731 = vmin.f32 %v1729, 1.0
          %v1732 = vmul.f32 %v1730, %v1684
          %v1733 = vmul.f32 %v1731, %v1685
          %v1734 = vld [vmem:[%s783] sm:$0xff]
          %v1735 = vld [vmem:[%s783 + $0x8] sm:$0xff]
          %v1736 = vmul.f32 %v1734, %v1684
          %v1737 = vmul.f32 %v1735, %v1685
          %v1738 = vsel %vm1307, %v1732, 0.0
          %v1739 = vsel %vm1307, %v1733, 0.0
          %v1740 = vadd.f32 %v1738, %v1739
          %1741 = vadd.xlane.f32.xlu0 %v1740
          %v1742 = vpop.xlane.xlu0 %1741
          %v1743 = vrot.slane %v1742, 4
          %v1744 = vadd.f32 %v1742, %v1743
          %v1745 = vrot.slane %v1744, 2
          %v1746 = vadd.f32 %v1744, %v1745
          %v1747 = vrot.slane %v1746, 1
          %v1748 = vadd.f32 %v1746, %v1747
          %s1749 = vtos %v1748
          %v1750 = vstv %s1749
          %v1751 = vsel %vm1307, %v1736, 0.0
          %v1752 = vsel %vm1307, %v1737, 0.0
          %v1753 = vadd.f32 %v1751, %v1752
          %1754 = vadd.xlane.f32.xlu0 %v1753
          %v1755 = vpop.xlane.xlu0 %1754
          %v1756 = vrot.slane %v1755, 4
          %v1757 = vadd.f32 %v1755, %v1756
          %v1758 = vrot.slane %v1757, 2
          %v1759 = vadd.f32 %v1757, %v1758
          %v1760 = vrot.slane %v1759, 1
          %v1761 = vadd.f32 %v1759, %v1760
          %s1762 = vtos %v1761
          %v1763 = vstv %s1762
          %v1764 = vsel %vm1307, %v1684, 0.0
          %v1765 = vsel %vm1307, %v1685, 0.0
          %v1766 = vadd.f32 %v1764, %v1765
          %1767 = vadd.xlane.f32.xlu0 %v1766
          %v1768 = vpop.xlane.xlu0 %1767
          %v1769 = vrot.slane %v1768, 4
          %v1770 = vadd.f32 %v1768, %v1769
          %v1771 = vrot.slane %v1770, 2
          %v1772 = vadd.f32 %v1770, %v1771
          %v1773 = vrot.slane %v1772, 1
          %v1774 = vadd.f32 %v1772, %v1773
          %s1775 = vtos %v1774
          %v1776 = vstv %s1775
          %v1777 = vld [vmem:[%s813] sm:$0xff]
          %v1778 = vld [vmem:[%s813 + $0x8] sm:$0xff]
          %v1779 = vld [vmem:[%s823] sm:$0xff]
          %v1780 = vld [vmem:[%s823 + $0x8] sm:$0xff]
          %v1781 = vld [vmem:[%s833] sm:$0xff]
          %v1782 = vld [vmem:[%s833 + $0x8] sm:$0xff]
          %v1783 = vsub.f32 %v1781, %v1779
          %v1784 = vsub.f32 %v1782, %v1780
          %v1785 = vand.u32 2147483647, %v1783
          %v1786 = vand.u32 2147483647, %v1784
          %v1787 = vadd.f32 %v1781, %v1779
          %v1788 = vadd.f32 %v1782, %v1780
          %v1789 = vand.u32 2147483647, %v1787
          %v1790 = vand.u32 2147483647, %v1788
          %v1791 = vrcp.pop %v1789
          %v1792 = vmul.f32 %v1789, %v1791
          %v1793 = vsub.f32 1.0, %v1792
          %v1794 = vmul.f32 %v1791, %v1793
          %v1795 = vadd.f32 %v1791, %v1794
          %vm1796 = vweird.f32 %v1789
          %vm1797 = vweird.f32 %v1791
          %vm1798 = vmor %vm1796, %vm1797
          %v1799 = vsel %vm1798, %v1791, %v1795
          %v1800 = vand.u32 2147483647, %v1789
          %vm1801 = vcmp.eq.f32.partialorder %v1800, 8.507059e+37
          %v1802 = vand.u32 %v1789, 2147483648
          %v1803 = vor.u32 1.1754944e-38, %v1802
          %v1804 = vsel %vm1801, %v1803, %v1799
          %v1805 = vmul.f32 %v1785, %v1804
          %v1806 = vrcp.pop %v1790
          %v1807 = vmul.f32 %v1790, %v1806
          %v1808 = vsub.f32 1.0, %v1807
          %v1809 = vmul.f32 %v1806, %v1808
          %v1810 = vadd.f32 %v1806, %v1809
          %vm1811 = vweird.f32 %v1790
          %vm1812 = vweird.f32 %v1806
          %vm1813 = vmor %vm1811, %vm1812
          %v1814 = vsel %vm1813, %v1806, %v1810
          %v1815 = vand.u32 2147483647, %v1790
          %vm1816 = vcmp.eq.f32.partialorder %v1815, 8.507059e+37
          %v1817 = vand.u32 %v1790, 2147483648
          %v1818 = vor.u32 1.1754944e-38, %v1817
          %v1819 = vsel %vm1816, %v1818, %v1814
          %v1820 = vmul.f32 %v1786, %v1819
          %v1821 = vmax.f32 %v1805, 0.0
          %v1822 = vmax.f32 %v1820, 0.0
          %v1823 = vmin.f32 %v1821, 1.0
          %v1824 = vmin.f32 %v1822, 1.0
          %v1825 = vmul.f32 %v1823, %v1777
          %v1826 = vmul.f32 %v1824, %v1778
          %v1827 = vld [vmem:[%s843] sm:$0xff]
          %v1828 = vld [vmem:[%s843 + $0x8] sm:$0xff]
          %v1829 = vmul.f32 %v1827, %v1777
          %v1830 = vmul.f32 %v1828, %v1778
          %v1831 = vsel %vm1307, %v1825, 0.0
          %v1832 = vsel %vm1307, %v1826, 0.0
          %v1833 = vadd.f32 %v1831, %v1832
          %1834 = vadd.xlane.f32.xlu0 %v1833
          %v1835 = vpop.xlane.xlu0 %1834
          %v1836 = vrot.slane %v1835, 4
          %v1837 = vadd.f32 %v1835, %v1836
          %v1838 = vrot.slane %v1837, 2
          %v1839 = vadd.f32 %v1837, %v1838
          %v1840 = vrot.slane %v1839, 1
          %v1841 = vadd.f32 %v1839, %v1840
          %s1842 = vtos %v1841
          %v1843 = vstv %s1842
          %v1844 = vsel %vm1307, %v1829, 0.0
          %v1845 = vsel %vm1307, %v1830, 0.0
          %v1846 = vadd.f32 %v1844, %v1845
          %1847 = vadd.xlane.f32.xlu0 %v1846
          %v1848 = vpop.xlane.xlu0 %1847
          %v1849 = vrot.slane %v1848, 4
          %v1850 = vadd.f32 %v1848, %v1849
          %v1851 = vrot.slane %v1850, 2
          %v1852 = vadd.f32 %v1850, %v1851
          %v1853 = vrot.slane %v1852, 1
          %v1854 = vadd.f32 %v1852, %v1853
          %s1855 = vtos %v1854
          %v1856 = vstv %s1855
          %v1857 = vsel %vm1307, %v1777, 0.0
          %v1858 = vsel %vm1307, %v1778, 0.0
          %v1859 = vadd.f32 %v1857, %v1858
          %1860 = vadd.xlane.f32.xlu0 %v1859
          %v1861 = vpop.xlane.xlu0 %1860
          %v1862 = vrot.slane %v1861, 4
          %v1863 = vadd.f32 %v1861, %v1862
          %v1864 = vrot.slane %v1863, 2
          %v1865 = vadd.f32 %v1863, %v1864
          %v1866 = vrot.slane %v1865, 1
          %v1867 = vadd.f32 %v1865, %v1866
          %s1868 = vtos %v1867
          %v1869 = vstv %s1868
          %v1870 = vsel %vm975, %v1320, %v1750
          %vm1871 = vcmask 15360
          %v1872 = vsel %vm1871, %v1870, %v1763
          %vm1873 = vcmask 23552
          %v1874 = vsel %vm1873, %v1872, %v1776
          %vm1875 = vcmask 31744
          %v1876 = vsel %vm1875, %v1874, %v1679
          %vm1877 = vcmask 39936
          %v1878 = vsel %vm1877, %v1876, %v1843
          %vm1879 = vcmask 48128
          %v1880 = vsel %vm1879, %v1878, %v1856
          %vm1881 = vcmask 56320
          %v1882 = vsel %vm1881, %v1880, %v1869
          %vm1883 = vcmask 64512
          %v1884 = vsel %vm1883, %v1882, 0.0
          %1885 = vst [vmem:[%s938] sm:$0x1] %v1884
          %v1886 = vmul.f32 %v1305, 0.33333334
          %v1887 = vmul.f32 %v1306, 0.33333334
          %1888 = vst.msk [vmem:[%s945] sm:$0xff] %vm1307, %v1886
          %1889 = vst.msk [vmem:[%s945 + $0x8] sm:$0xff] %vm1307, %v1887
        $region120: #{tpu_custom_call.1} parent=67 // pred_fallthru
          _
        %p1890 = scmp.gt.s32.totalorder %s57, 0
        // Predicated region
        $region121: #{tpu_custom_call.1} parent=67 // pred_check
          %p1891 = pneg %p1890
        $region122: #{tpu_custom_call.1} parent=67 // pred_check_branch
          %1893 = sbr.rel (%p1891) target = $region124
        $region123: #{tpu_custom_call.1} parent=67 // pred_region
          %v1894 = vld [vmem:[%s938] sm:$0x1]
          %v1895 = vsel %vm975, %v1320, 0.0
          %vm1896 = vcmask 31744
          %v1897 = vsel %vm1896, %v1895, %v1679
          %vm1898 = vcmask 39936
          %v1899 = vsel %vm1898, %v1897, 0.0
          %v1900 = vadd.f32 %v1894, %v1899
          %1901 = vst [vmem:[%s938] sm:$0x1] %v1900
          %v1902 = vld [vmem:[%s945] sm:$0xff]
          %v1903 = vld [vmem:[%s945 + $0x8] sm:$0xff]
          %v1904 = vmul.f32 %v1305, 0.33333334
          %v1905 = vmul.f32 %v1306, 0.33333334
          %v1906 = vadd.f32 %v1902, %v1904
          %v1907 = vadd.f32 %v1903, %v1905
          %1908 = vst.msk [vmem:[%s945] sm:$0xff] %vm1307, %v1906
          %1909 = vst.msk [vmem:[%s945 + $0x8] sm:$0xff] %vm1307, %v1907
        $region124: #{tpu_custom_call.1} parent=67 // pred_fallthru
          _
        %s1910 = sand.u32 %s392, 1
        %s1911 = scalar_lea.sflag [#allocation4], %s1910
        %s1912 = sand.u32 %s392, 1
        %s1913 = scalar_lea.vmem [#allocation22], %s1912
        %s1914 = sand.u32 %s418, 1
        %s1915 = scalar_lea.sflag [#allocation24], %s1914
        %s1916 = sand.u32 %s418, 1
        %s1917 = smul.addr %s1916, 16
        %s1918 = scalar_lea.vmem [#allocation23], %s1917
        // Predicated region
        $region125: #{tpu_custom_call.1} parent=67 // pred_check
          %p1919 = pneg %p402
        $region126: #{tpu_custom_call.1} parent=67 // pred_check_branch
          %1921 = sbr.rel (%p1919) target = $region128
        $region127: #{tpu_custom_call.1} parent=67 // pred_region
          %1923 = vsyncadd %s1911, 0
          %s1924 = scalar_lea.hbm %s12, %s56
          %s1926 = sshll.u32 %s1913, 4
          %s1927 = int_to_ptr.vmem [resolvable:$true] %s1926
          %s1928 = sshll.u32 %s1924, 4
          %s1929 = int_to_ptr.hbm [resolvable:$true] %s1928
          %1931 = dma.vmem_to_hbm [thread:$0]  %s1927, 16, %s1929, %s1911
        $region128: #{tpu_custom_call.1} parent=67 // pred_fallthru
          _
        // Predicated region
        $region129: #{tpu_custom_call.1} parent=67 // pred_check
          %p1932 = pneg %p428
        $region130: #{tpu_custom_call.1} parent=67 // pred_check_branch
          %1934 = sbr.rel (%p1932) target = $region132
        $region131: #{tpu_custom_call.1} parent=67 // pred_region
          %1936 = vsyncadd %s1915, 0
          %s1937 = smul.addr %s56, 2
          %s1938 = smul.addr %s1937, 8
          %s1939 = scalar_lea.hbm %s13, %s1938
          %s1940 = sshll.u32 %s1918, 4
          %s1941 = int_to_ptr.vmem [resolvable:$true] %s1940
          %s1942 = sshll.u32 %s1939, 4
          %s1943 = int_to_ptr.hbm [resolvable:$true] %s1942
          %1948 = dma.vmem_to_hbm [thread:$0]  %s1941, 256, %s1943, %s1915, 128, 128, 8
        $region132: #{tpu_custom_call.1} parent=67 // pred_fallthru
          _
      $region68: #{tpu_custom_call.1} parent=5 // pred_fallthru
        _
      %p1949 = scmp.le.s32.totalorder 2, %s47
      // Predicated region
      $region133: #{tpu_custom_call.1} parent=5 // pred_check
        %p1950 = pneg %p1949
      $region134: #{tpu_custom_call.1} parent=5 // pred_check_branch
        %1952 = sbr.rel (%p1950) target = $region136
      $region135: #{tpu_custom_call.1} parent=5 // pred_region
        %s1953 = ssub.s32 %s47, 2
        // Predicated region
        $region137: #{tpu_custom_call.1} parent=135 // pred_check
          %p1954 = pneg %p408
        $region138: #{tpu_custom_call.1} parent=135 // pred_check_branch
          %1956 = sbr.rel (%p1954) target = $region140
        $region139: #{tpu_custom_call.1} parent=135 // pred_region
          %s1957 = sand.u32 %s393, 1
          %s1958 = scalar_lea.sflag [#allocation4], %s1957
          %s1959 = sand.u32 %s393, 1
          %s1960 = scalar_lea.vmem [#allocation22], %s1959
          %1962 = dma.done %s1958, 16
        $region140: #{tpu_custom_call.1} parent=135 // pred_fallthru
          _
        // Predicated region
        $region141: #{tpu_custom_call.1} parent=135 // pred_check
          %p1963 = pneg %p434
        $region142: #{tpu_custom_call.1} parent=135 // pred_check_branch
          %1965 = sbr.rel (%p1963) target = $region144
        $region143: #{tpu_custom_call.1} parent=135 // pred_region
          %s1966 = sand.u32 %s419, 1
          %s1967 = scalar_lea.sflag [#allocation24], %s1966
          %s1968 = sand.u32 %s419, 1
          %s1969 = smul.addr %s1968, 16
          %s1970 = scalar_lea.vmem [#allocation23], %s1969
          %1972 = dma.done %s1967, 256
        $region144: #{tpu_custom_call.1} parent=135 // pred_fallthru
          _
      $region136: #{tpu_custom_call.1} parent=5 // pred_fallthru
        _
    $region6: #{tpu_custom_call.1} parent=1 // loop_footer
      %s51 = sadd.s32 1, %s47
    $region7: #{tpu_custom_call.1} parent=1 // loop_footer_branch
      %46 = sbr.rel target = $region3
    $region8: #{tpu_custom_call.1} parent=1 // loop_exit
      _
    %1973 = vsyncpa [#allocation3], 1
    %s1974 = scalar_lea.sflag [#allocation3], 1
    %1975 = vsyncpa %s1974, 1
    %1976 = vsyncpa [#allocation6], 1
    %s1977 = scalar_lea.sflag [#allocation6], 1
    %1978 = vsyncpa %s1977, 1
    %1979 = vsyncpa [#allocation9], 1
    %s1980 = scalar_lea.sflag [#allocation9], 1
    %1981 = vsyncpa %s1980, 1
    %1982 = vsyncpa [#allocation12], 1
    %s1983 = scalar_lea.sflag [#allocation12], 1
    %1984 = vsyncpa %s1983, 1
    %1985 = vsyncpa [#allocation15], 1
    %s1986 = scalar_lea.sflag [#allocation15], 1
    %1987 = vsyncpa %s1986, 1
    %1988 = vsyncpa [#allocation18], 1
    %s1989 = scalar_lea.sflag [#allocation18], 1
    %1990 = vsyncpa %s1989, 1
    %1991 = vsyncpa [#allocation21], 1
    %s1992 = scalar_lea.sflag [#allocation21], 1
    %1993 = vsyncpa %s1992, 1
    %1994 = vsyncpa [#allocation4], 1
    %s1995 = scalar_lea.sflag [#allocation4], 1
    %1996 = vsyncpa %s1995, 1
    %1997 = vsyncpa [#allocation24], 1
    %s1998 = scalar_lea.sflag [#allocation24], 1
    %1999 = vsyncpa %s1998, 1

</llo_original>
